<compile_context>
chip_gen: v6e
topology: v6e:2x2x1
jax: 0.10.0
libtpu: 0.0.40
codegen_flags: <defaults>
</compile_context>

<pallas_src>
import functools
import math

import jax
import jax.numpy as jnp
import numpy as np
from jax.experimental import pallas as pl
from jax.experimental.pallas import tpu as pltpu


# ----------------------------------------------------------------------------
# Host-side constants (built once, tiny).
# ----------------------------------------------------------------------------
_POOL_CHUNK = 256
_POOL_NP = np.zeros((_POOL_CHUNK, _POOL_CHUNK // 2), np.float32)
_POOL_NP[2 * np.arange(_POOL_CHUNK // 2), np.arange(_POOL_CHUNK // 2)] = 0.5
_POOL_NP[2 * np.arange(_POOL_CHUNK // 2) + 1, np.arange(_POOL_CHUNK // 2)] = 0.5

_TARGET_LANES = 2048


@functools.lru_cache(maxsize=None)
def _segment_mean_matrix(k, lp):
    """Per-sample averaging matrix for AdaptiveAvgPool1d(1): (k*lp, k)."""
    m = np.zeros((k * lp, k), np.float32)
    for s in range(k):
        m[s * lp:(s + 1) * lp, s] = 1.0 / lp
    return m


# ----------------------------------------------------------------------------
# Pallas kernel: one batch tile of k samples (tile_n = k*L lanes) per step.
# ----------------------------------------------------------------------------
def dnn1_kernel(x_ref, w1_ref, w2_ref, rw_ref, wc_ref, bias_ref,
                pool_ref, m_ref, out_ref):
    f32 = jnp.float32
    bf16 = jnp.bfloat16

    bias = bias_ref[...]                                    # (80, 19) f32
    pmat = pool_ref[...]                                    # (256, 128) bf16

    def conv_relu(w, b, h):
        # 1x1 Conv1d (+ folded BN) + ReLU == relu(W @ h + b); bf16 MXU, f32 acc.
        acc = jnp.dot(w, h.astype(bf16), preferred_element_type=f32)
        return jnp.maximum(acc + b, 0.0)

    def avgpool2(h):
        # AvgPool1d(2) over the lane axis, chunk-wise so cost is linear in N.
        # Chunk boundaries are even, so no pooled pair straddles a chunk.
        n = h.shape[1]
        hb = h.astype(bf16)
        pieces = []
        i = 0
        while i < n:                                        # static unroll
            c = min(_POOL_CHUNK, n - i)
            pieces.append(jnp.dot(hb[:, i:i + c], pmat[:c, :c // 2],
                                  preferred_element_type=f32))
            i += c
        if len(pieces) == 1:
            return pieces[0]
        return jnp.concatenate(pieces, axis=1)

    def residue(idx, h):
        # _ResidueModule: x + relu(bn(conv(relu(bn(conv(x))))))  (BN folded)
        t = conv_relu(rw_ref[idx, 0], bias[:32, 2 + 2 * idx:3 + 2 * idx], h)
        t = conv_relu(rw_ref[idx, 1], bias[:32, 3 + 2 * idx:4 + 2 * idx], t)
        return h + t

    x = x_ref[...]                                          # (80, N) bf16
    # Conv1d(80,80,1,groups=20)+BN+ReLU (block-diagonal weight, BN folded).
    h = conv_relu(w1_ref[...], bias[:, 0:1], x)             # (80, N)
    # Conv1d(80,32,1)+BN+ReLU.
    h = conv_relu(w2_ref[...], bias[:32, 1:2], h)           # (32, N)

    h = residue(0, h); h = residue(1, h); h = avgpool2(h)   # (32, N/2)
    h = residue(2, h); h = residue(3, h); h = avgpool2(h)   # (32, N/4)
    h = residue(4, h); h = residue(5, h); h = avgpool2(h)   # (32, N/8)
    h = residue(6, h); h = residue(7, h)

    # AdaptiveAvgPool1d(1) per sample + Linear(32, 3), batched over the tile.
    v = jnp.dot(h, m_ref[...], preferred_element_type=f32)  # (32, k) f32
    logits = jnp.dot(wc_ref[...], v, preferred_element_type=f32) + bias[:3, 18:19]
    out_ref[0] = logits                                     # (3, k)


# ----------------------------------------------------------------------------
# Parameter construction (deterministic) and BN folding (plain-JAX glue).
# ----------------------------------------------------------------------------
_EPS = 1e-5


def _fold_bn(w, b, gamma, beta, mean, var):
    scale = gamma / jnp.sqrt(var + _EPS)
    return w * scale[:, None], scale * (b - mean) + beta


def _bn_params(key, c):
    k1, k2, k3, k4 = jax.random.split(key, 4)
    gamma = 1.0 + 0.1 * jax.random.normal(k1, (c,), jnp.float32)
    beta = 0.1 * jax.random.normal(k2, (c,), jnp.float32)
    mean = 0.1 * jax.random.normal(k3, (c,), jnp.float32)
    var = 1.0 + 0.1 * jnp.abs(jax.random.normal(k4, (c,), jnp.float32))
    return gamma, beta, mean, var


def init_params(key):
    ks = jax.random.split(key, 16)
    f32 = jnp.float32

    # Conv1d(80, 80, 1, groups=20): per-group (4 -> 4) weights -> block-diag.
    w1g = jax.random.normal(ks[0], (80, 4), f32) * (1.0 / jnp.sqrt(4.0))
    b1c = 0.05 * jax.random.normal(ks[1], (80,), f32)
    blocks = w1g.reshape(20, 4, 4)
    w1_bd = jax.scipy.linalg.block_diag(*[blocks[g] for g in range(20)])
    w1, b1 = _fold_bn(w1_bd, b1c, *_bn_params(ks[2], 80))

    # Conv1d(80, 32, 1) + BN(32)
    w2c = jax.random.normal(ks[3], (32, 80), f32) * (1.0 / jnp.sqrt(80.0))
    b2c = 0.05 * jax.random.normal(ks[4], (32,), f32)
    w2, b2 = _fold_bn(w2c, b2c, *_bn_params(ks[5], 32))

    # 8 _ResidueModule(32): each has two (Conv1d(32,32,1) + BN(32)) stages.
    rkeys = jax.random.split(ks[6], 8 * 2 * 3).reshape(8, 2, 3, 2)
    rw_list, rb_cols = [], []
    for m in range(8):
        wrow = []
        for s in range(2):
            kw, kb, kbn = rkeys[m, s, 0], rkeys[m, s, 1], rkeys[m, s, 2]
            wc_ = jax.random.normal(kw, (32, 32), f32) * (1.0 / jnp.sqrt(32.0))
            bc_ = 0.05 * jax.random.normal(kb, (32,), f32)
            wf, bf = _fold_bn(wc_, bc_, *_bn_params(kbn, 32))
            wrow.append(wf)
            rb_cols.append(bf)
        rw_list.append(jnp.stack(wrow))
    rw = jnp.stack(rw_list)                                 # (8, 2, 32, 32)

    # Linear(32, 3)
    wcl = jax.random.normal(ks[7], (3, 32), f32) * (1.0 / jnp.sqrt(32.0))
    bcl = 0.05 * jax.random.normal(ks[8], (3,), f32)

    # Pack all biases into one lane-dense f32 table (80, 19):
    #   col 0: conv1 (80), col 1: conv2 (32), cols 2..17: residue stage biases,
    #   col 18: classifier (3).
    biases = jnp.zeros((80, 19), f32)
    biases = biases.at[:, 0].set(b1)
    biases = biases.at[:32, 1].set(b2)
    for i, bcol in enumerate(rb_cols):
        biases = biases.at[:32, 2 + i].set(bcol)
    biases = biases.at[:3, 18].set(bcl)

    return (w1.astype(jnp.bfloat16), w2.astype(jnp.bfloat16),
            rw.astype(jnp.bfloat16), wcl, biases)


# ----------------------------------------------------------------------------
# Wrapper around pallas_call.
# ----------------------------------------------------------------------------
def dnn1_forward(x, params):
    w1, w2, rw, wcl, biases = params
    B = x.shape[0]
    x = x.reshape(B, 80, -1)                                # x.view(B, 80, -1)
    L = x.shape[-1]
    assert L % 8 == 0, "three AvgPool1d(2) stages require L % 8 == 0"

    # Batch tiling: tile_n = k*L lanes, multiple of 128, targeting ~2048 lanes,
    # while keeping >= 2 grid steps when the batch allows (v7x megacore).
    k_min = math.lcm(L, 128) // L                           # min samples / tile
    n_units = -(-B // k_min)
    mult = max(1, min(_TARGET_LANES // (k_min * L), n_units))
    if n_units >= 2:
        mult = min(mult, max(1, n_units // 2))
    k = k_min * mult                                        # samples per tile
    tile_n = k * L                                          # lanes per tile
    T = -(-n_units // mult)                                 # number of tiles
    b_pad = T * k

    xb = x.astype(jnp.bfloat16)
    if b_pad != B:
        xb = jnp.pad(xb, ((0, b_pad - B), (0, 0), (0, 0)))
    # (B_pad, 80, L) -> (80, B_pad*L): channels on sublanes, batch*pos on lanes.
    x_flat = jnp.transpose(xb, (1, 0, 2)).reshape(80, b_pad * L)

    pool_b = jnp.asarray(_POOL_NP, dtype=jnp.bfloat16)      # (256, 128)
    mmat = jnp.asarray(_segment_mean_matrix(k, L // 8))     # (tile_n/8, k) f32

    out = pl.pallas_call(
        dnn1_kernel,
        out_shape=jax.ShapeDtypeStruct((T, 3, k), jnp.float32),
        grid_spec=pltpu.PrefetchScalarGridSpec(
            num_scalar_prefetch=0,
            grid=(T,),
            in_specs=[
                pl.BlockSpec((80, tile_n), lambda t: (0, t)),          # x tile
                pl.BlockSpec((80, 80), lambda t: (0, 0)),              # w1
                pl.BlockSpec((32, 80), lambda t: (0, 0)),              # w2
                pl.BlockSpec((8, 2, 32, 32), lambda t: (0, 0, 0, 0)),  # residue w
                pl.BlockSpec((3, 32), lambda t: (0, 0)),               # classifier w
                pl.BlockSpec((80, 19), lambda t: (0, 0)),              # packed biases
                pl.BlockSpec((256, 128), lambda t: (0, 0)),            # pool matrix
                pl.BlockSpec((tile_n // 8, k), lambda t: (0, 0)),      # per-sample mean
            ],
            out_specs=pl.BlockSpec((1, 3, k), lambda t: (t, 0, 0)),
        ),
        compiler_params=pltpu.CompilerParams(
            dimension_semantics=("parallel",),
            vmem_limit_bytes=48 * 1024 * 1024),
    )(x_flat, w1, w2, rw, wcl, biases, pool_b, mmat)

    # (T, 3, k) -> (T*k, 3) -> drop batch padding (padded rows are garbage).
    logits = jnp.transpose(out, (0, 2, 1)).reshape(b_pad, 3)
    return logits[:B]                                       # (B, 3)


# ----------------------------------------------------------------------------
# Pure-JAX reference with matching (bf16-operand, f32-accumulate) numerics.
# ----------------------------------------------------------------------------
def dnn1_reference(x, params):
    w1, w2, rw, wcl, biases = params
    bf16, f32 = jnp.bfloat16, jnp.float32
    B = x.shape[0]
    h = x.reshape(B, 80, -1).astype(bf16).astype(f32)

    def cr(w, b, h):
        acc = jnp.einsum('oc,bcl->bol', w, h.astype(bf16),
                         preferred_element_type=f32)
        return jnp.maximum(acc + b[None, :, None], 0.0)

    def res(i, h):
        t = cr(rw[i, 0], biases[:32, 2 + 2 * i], h)
        t = cr(rw[i, 1], biases[:32, 3 + 2 * i], t)
        return h + t

    def pool(h):
        hb = h.astype(bf16).astype(f32)   # kernel rounds h to bf16 before pooling
        return 0.5 * (hb[..., 0::2] + hb[..., 1::2])

    h = cr(w1, biases[:, 0], h)
    h = cr(w2, biases[:32, 1], h)
    h = res(0, h); h = res(1, h); h = pool(h)
    h = res(2, h); h = res(3, h); h = pool(h)
    h = res(4, h); h = res(5, h); h = pool(h)
    h = res(6, h); h = res(7, h)
    v = h.mean(-1)                                          # (B, 32)
    return v @ wcl.T + biases[:3, 18][None]                 # (B, 3)


if __name__ == "__main__":
    key = jax.random.PRNGKey(0)
    pkey, xkey1, xkey2 = jax.random.split(key, 3)
    params = init_params(pkey)

    # Small case: single 128-lane tile.
    B1, L1 = 2, 16
    x1 = jax.random.normal(xkey1, (B1, 80, L1), jnp.float32)
    out1 = jax.block_until_ready(dnn1_forward(x1, params))
    ref1 = jax.block_until_ready(dnn1_reference(x1, params))
    assert out1.shape == (B1, 3), out1.shape
    assert jnp.allclose(out1, ref1, atol=1e-2, rtol=1e-2), (
        f"max abs err (small) = {jnp.max(jnp.abs(out1 - ref1))}")

    # Medium case: 2 grid tiles of 1024 lanes, multi-chunk pooling path.
    B2, L2 = 32, 64
    x2 = jax.random.normal(xkey2, (B2, 80, L2), jnp.float32)
    out2 = jax.block_until_ready(dnn1_forward(x2, params))
    ref2 = jax.block_until_ready(dnn1_reference(x2, params))
    assert out2.shape == (B2, 3), out2.shape
    assert jnp.allclose(out2, ref2, atol=1e-2, rtol=1e-2), (
        f"max abs err (medium) = {jnp.max(jnp.abs(out2 - ref2))}")

    print("KERNEL_OK")
</pallas_src>

<mosaic_0001>
module attributes {stable_mosaic.version = 11 : i64} {
  func.func @dnn1_kernel(%arg0: i32, %arg1: memref<80x128xbf16, #tpu.memory_space<vmem>>, %arg2: memref<80x80xbf16, #tpu.memory_space<vmem>>, %arg3: memref<32x80xbf16, #tpu.memory_space<vmem>>, %arg4: memref<8x2x32x32xbf16, #tpu.memory_space<vmem>>, %arg5: memref<3x32xf32, #tpu.memory_space<vmem>>, %arg6: memref<80x19xf32, #tpu.memory_space<vmem>>, %arg7: memref<256x128xbf16, #tpu.memory_space<vmem>>, %arg8: memref<16x8xf32, #tpu.memory_space<vmem>>, %arg9: memref<1x3x8xf32, #tpu.memory_space<vmem>>) attributes {dimension_semantics = [#tpu.dimension_semantics<parallel>], iteration_bounds = array<i64: 1>, scalar_prefetch = 0 : i64, scratch_operands = 0 : i64, tpu.core_type = #tpu.core_type<tc>, window_params = [{transform_indices = @transform_0, window_bounds = array<i64: 80, 128>}, {pipeline_mode = #tpu.pipeline_mode<synchronous>, transform_indices = @transform_1, window_bounds = array<i64: 80, 80>}, {pipeline_mode = #tpu.pipeline_mode<synchronous>, transform_indices = @transform_2, window_bounds = array<i64: 32, 80>}, {pipeline_mode = #tpu.pipeline_mode<synchronous>, transform_indices = @transform_3, window_bounds = array<i64: 8, 2, 32, 32>}, {pipeline_mode = #tpu.pipeline_mode<synchronous>, transform_indices = @transform_4, window_bounds = array<i64: 3, 32>}, {pipeline_mode = #tpu.pipeline_mode<synchronous>, transform_indices = @transform_5, window_bounds = array<i64: 80, 19>}, {pipeline_mode = #tpu.pipeline_mode<synchronous>, transform_indices = @transform_6, window_bounds = array<i64: 256, 128>}, {pipeline_mode = #tpu.pipeline_mode<synchronous>, transform_indices = @transform_7, window_bounds = array<i64: 16, 8>}, {transform_indices = @transform_8, window_bounds = array<i64: 1, 3, 8>}]} {
    %c0 = arith.constant 0 : index
    %c0_0 = arith.constant 0 : index
    %0 = vector.load %arg6[%c0, %c0_0] : memref<80x19xf32, #tpu.memory_space<vmem>>, vector<80x19xf32>
    %c0_1 = arith.constant 0 : index
    %c0_2 = arith.constant 0 : index
    %1 = vector.load %arg7[%c0_1, %c0_2] : memref<256x128xbf16, #tpu.memory_space<vmem>>, vector<256x128xbf16>
    %c0_3 = arith.constant 0 : index
    %c0_4 = arith.constant 0 : index
    %2 = vector.load %arg1[%c0_3, %c0_4] : memref<80x128xbf16, #tpu.memory_space<vmem>>, vector<80x128xbf16>
    %c0_5 = arith.constant 0 : index
    %c0_6 = arith.constant 0 : index
    %3 = vector.load %arg2[%c0_5, %c0_6] : memref<80x80xbf16, #tpu.memory_space<vmem>>, vector<80x80xbf16>
    %4 = vector.extract_strided_slice %0 {offsets = [0, 0], sizes = [80, 1], strides = [1, 1]} : vector<80x19xf32> to vector<80x1xf32>
    %cst = arith.constant dense<0.000000e+00> : vector<80x128xf32>
    %5 = tpu.matmul %3, %2, %cst {dimension_numbers = #tpu.dot_dimension_numbers<[1], [0], [0], [1], [0, 0, 1, 1], [], []>} : vector<80x80xbf16>, vector<80x128xbf16>, vector<80x128xf32> -> vector<80x128xf32>
    %6 = vector.broadcast %4 : vector<80x1xf32> to vector<80x128xf32>
    %7 = arith.addf %5, %6 : vector<80x128xf32>
    %cst_7 = arith.constant 0.000000e+00 : f32
    %8 = vector.broadcast %cst_7 : f32 to vector<80x128xf32>
    %9 = arith.maximumf %7, %8 : vector<80x128xf32>
    %c0_8 = arith.constant 0 : index
    %c0_9 = arith.constant 0 : index
    %10 = vector.load %arg3[%c0_8, %c0_9] : memref<32x80xbf16, #tpu.memory_space<vmem>>, vector<32x80xbf16>
    %11 = vector.extract_strided_slice %0 {offsets = [0, 1], sizes = [32, 1], strides = [1, 1]} : vector<80x19xf32> to vector<32x1xf32>
    %12 = arith.truncf %9 : vector<80x128xf32> to vector<80x128xbf16>
    %cst_10 = arith.constant dense<0.000000e+00> : vector<32x128xf32>
    %13 = tpu.matmul %10, %12, %cst_10 {dimension_numbers = #tpu.dot_dimension_numbers<[1], [0], [0], [1], [0, 0, 1, 1], [], []>} : vector<32x80xbf16>, vector<80x128xbf16>, vector<32x128xf32> -> vector<32x128xf32>
    %14 = vector.broadcast %11 : vector<32x1xf32> to vector<32x128xf32>
    %15 = arith.addf %13, %14 : vector<32x128xf32>
    %cst_11 = arith.constant 0.000000e+00 : f32
    %16 = vector.broadcast %cst_11 : f32 to vector<32x128xf32>
    %17 = arith.maximumf %15, %16 : vector<32x128xf32>
    %c0_12 = arith.constant 0 : index
    %c0_13 = arith.constant 0 : index
    %c0_14 = arith.constant 0 : index
    %c0_15 = arith.constant 0 : index
    %18 = vector.load %arg4[%c0_12, %c0_13, %c0_14, %c0_15] : memref<8x2x32x32xbf16, #tpu.memory_space<vmem>>, vector<1x1x32x32xbf16>
    %19 = vector.shape_cast %18 : vector<1x1x32x32xbf16> to vector<32x32xbf16>
    %20 = vector.extract_strided_slice %0 {offsets = [0, 2], sizes = [32, 1], strides = [1, 1]} : vector<80x19xf32> to vector<32x1xf32>
    %21 = arith.truncf %17 : vector<32x128xf32> to vector<32x128xbf16>
    %cst_16 = arith.constant dense<0.000000e+00> : vector<32x128xf32>
    %22 = tpu.matmul %19, %21, %cst_16 {dimension_numbers = #tpu.dot_dimension_numbers<[1], [0], [0], [1], [0, 0, 1, 1], [], []>} : vector<32x32xbf16>, vector<32x128xbf16>, vector<32x128xf32> -> vector<32x128xf32>
    %23 = vector.broadcast %20 : vector<32x1xf32> to vector<32x128xf32>
    %24 = arith.addf %22, %23 : vector<32x128xf32>
    %cst_17 = arith.constant 0.000000e+00 : f32
    %25 = vector.broadcast %cst_17 : f32 to vector<32x128xf32>
    %26 = arith.maximumf %24, %25 : vector<32x128xf32>
    %c0_18 = arith.constant 0 : index
    %c1 = arith.constant 1 : index
    %c0_19 = arith.constant 0 : index
    %c0_20 = arith.constant 0 : index
    %27 = vector.load %arg4[%c0_18, %c1, %c0_19, %c0_20] : memref<8x2x32x32xbf16, #tpu.memory_space<vmem>>, vector<1x1x32x32xbf16>
    %28 = vector.shape_cast %27 : vector<1x1x32x32xbf16> to vector<32x32xbf16>
    %29 = vector.extract_strided_slice %0 {offsets = [0, 3], sizes = [32, 1], strides = [1, 1]} : vector<80x19xf32> to vector<32x1xf32>
    %30 = arith.truncf %26 : vector<32x128xf32> to vector<32x128xbf16>
    %cst_21 = arith.constant dense<0.000000e+00> : vector<32x128xf32>
    %31 = tpu.matmul %28, %30, %cst_21 {dimension_numbers = #tpu.dot_dimension_numbers<[1], [0], [0], [1], [0, 0, 1, 1], [], []>} : vector<32x32xbf16>, vector<32x128xbf16>, vector<32x128xf32> -> vector<32x128xf32>
    %32 = vector.broadcast %29 : vector<32x1xf32> to vector<32x128xf32>
    %33 = arith.addf %31, %32 : vector<32x128xf32>
    %cst_22 = arith.constant 0.000000e+00 : f32
    %34 = vector.broadcast %cst_22 : f32 to vector<32x128xf32>
    %35 = arith.maximumf %33, %34 : vector<32x128xf32>
    %36 = arith.addf %17, %35 : vector<32x128xf32>
    %c1_23 = arith.constant 1 : index
    %c0_24 = arith.constant 0 : index
    %c0_25 = arith.constant 0 : index
    %c0_26 = arith.constant 0 : index
    %37 = vector.load %arg4[%c1_23, %c0_24, %c0_25, %c0_26] : memref<8x2x32x32xbf16, #tpu.memory_space<vmem>>, vector<1x1x32x32xbf16>
    %38 = vector.shape_cast %37 : vector<1x1x32x32xbf16> to vector<32x32xbf16>
    %39 = vector.extract_strided_slice %0 {offsets = [0, 4], sizes = [32, 1], strides = [1, 1]} : vector<80x19xf32> to vector<32x1xf32>
    %40 = arith.truncf %36 : vector<32x128xf32> to vector<32x128xbf16>
    %cst_27 = arith.constant dense<0.000000e+00> : vector<32x128xf32>
    %41 = tpu.matmul %38, %40, %cst_27 {dimension_numbers = #tpu.dot_dimension_numbers<[1], [0], [0], [1], [0, 0, 1, 1], [], []>} : vector<32x32xbf16>, vector<32x128xbf16>, vector<32x128xf32> -> vector<32x128xf32>
    %42 = vector.broadcast %39 : vector<32x1xf32> to vector<32x128xf32>
    %43 = arith.addf %41, %42 : vector<32x128xf32>
    %cst_28 = arith.constant 0.000000e+00 : f32
    %44 = vector.broadcast %cst_28 : f32 to vector<32x128xf32>
    %45 = arith.maximumf %43, %44 : vector<32x128xf32>
    %c1_29 = arith.constant 1 : index
    %c1_30 = arith.constant 1 : index
    %c0_31 = arith.constant 0 : index
    %c0_32 = arith.constant 0 : index
    %46 = vector.load %arg4[%c1_29, %c1_30, %c0_31, %c0_32] : memref<8x2x32x32xbf16, #tpu.memory_space<vmem>>, vector<1x1x32x32xbf16>
    %47 = vector.shape_cast %46 : vector<1x1x32x32xbf16> to vector<32x32xbf16>
    %48 = vector.extract_strided_slice %0 {offsets = [0, 5], sizes = [32, 1], strides = [1, 1]} : vector<80x19xf32> to vector<32x1xf32>
    %49 = arith.truncf %45 : vector<32x128xf32> to vector<32x128xbf16>
    %cst_33 = arith.constant dense<0.000000e+00> : vector<32x128xf32>
    %50 = tpu.matmul %47, %49, %cst_33 {dimension_numbers = #tpu.dot_dimension_numbers<[1], [0], [0], [1], [0, 0, 1, 1], [], []>} : vector<32x32xbf16>, vector<32x128xbf16>, vector<32x128xf32> -> vector<32x128xf32>
    %51 = vector.broadcast %48 : vector<32x1xf32> to vector<32x128xf32>
    %52 = arith.addf %50, %51 : vector<32x128xf32>
    %cst_34 = arith.constant 0.000000e+00 : f32
    %53 = vector.broadcast %cst_34 : f32 to vector<32x128xf32>
    %54 = arith.maximumf %52, %53 : vector<32x128xf32>
    %55 = arith.addf %36, %54 : vector<32x128xf32>
    %56 = arith.truncf %55 : vector<32x128xf32> to vector<32x128xbf16>
    %57 = vector.extract_strided_slice %1 {offsets = [0, 0], sizes = [128, 64], strides = [1, 1]} : vector<256x128xbf16> to vector<128x64xbf16>
    %cst_35 = arith.constant dense<0.000000e+00> : vector<32x64xf32>
    %58 = tpu.matmul %56, %57, %cst_35 {dimension_numbers = #tpu.dot_dimension_numbers<[1], [0], [0], [1], [0, 0, 1, 1], [], []>} : vector<32x128xbf16>, vector<128x64xbf16>, vector<32x64xf32> -> vector<32x64xf32>
    %c2 = arith.constant 2 : index
    %c0_36 = arith.constant 0 : index
    %c0_37 = arith.constant 0 : index
    %c0_38 = arith.constant 0 : index
    %59 = vector.load %arg4[%c2, %c0_36, %c0_37, %c0_38] : memref<8x2x32x32xbf16, #tpu.memory_space<vmem>>, vector<1x1x32x32xbf16>
    %60 = vector.shape_cast %59 : vector<1x1x32x32xbf16> to vector<32x32xbf16>
    %61 = vector.extract_strided_slice %0 {offsets = [0, 6], sizes = [32, 1], strides = [1, 1]} : vector<80x19xf32> to vector<32x1xf32>
    %62 = arith.truncf %58 : vector<32x64xf32> to vector<32x64xbf16>
    %cst_39 = arith.constant dense<0.000000e+00> : vector<32x64xf32>
    %63 = tpu.matmul %60, %62, %cst_39 {dimension_numbers = #tpu.dot_dimension_numbers<[1], [0], [0], [1], [0, 0, 1, 1], [], []>} : vector<32x32xbf16>, vector<32x64xbf16>, vector<32x64xf32> -> vector<32x64xf32>
    %64 = vector.broadcast %61 : vector<32x1xf32> to vector<32x64xf32>
    %65 = arith.addf %63, %64 : vector<32x64xf32>
    %cst_40 = arith.constant 0.000000e+00 : f32
    %66 = vector.broadcast %cst_40 : f32 to vector<32x64xf32>
    %67 = arith.maximumf %65, %66 : vector<32x64xf32>
    %c2_41 = arith.constant 2 : index
    %c1_42 = arith.constant 1 : index
    %c0_43 = arith.constant 0 : index
    %c0_44 = arith.constant 0 : index
    %68 = vector.load %arg4[%c2_41, %c1_42, %c0_43, %c0_44] : memref<8x2x32x32xbf16, #tpu.memory_space<vmem>>, vector<1x1x32x32xbf16>
    %69 = vector.shape_cast %68 : vector<1x1x32x32xbf16> to vector<32x32xbf16>
    %70 = vector.extract_strided_slice %0 {offsets = [0, 7], sizes = [32, 1], strides = [1, 1]} : vector<80x19xf32> to vector<32x1xf32>
    %71 = arith.truncf %67 : vector<32x64xf32> to vector<32x64xbf16>
    %cst_45 = arith.constant dense<0.000000e+00> : vector<32x64xf32>
    %72 = tpu.matmul %69, %71, %cst_45 {dimension_numbers = #tpu.dot_dimension_numbers<[1], [0], [0], [1], [0, 0, 1, 1], [], []>} : vector<32x32xbf16>, vector<32x64xbf16>, vector<32x64xf32> -> vector<32x64xf32>
    %73 = vector.broadcast %70 : vector<32x1xf32> to vector<32x64xf32>
    %74 = arith.addf %72, %73 : vector<32x64xf32>
    %cst_46 = arith.constant 0.000000e+00 : f32
    %75 = vector.broadcast %cst_46 : f32 to vector<32x64xf32>
    %76 = arith.maximumf %74, %75 : vector<32x64xf32>
    %77 = arith.addf %58, %76 : vector<32x64xf32>
    %c3 = arith.constant 3 : index
    %c0_47 = arith.constant 0 : index
    %c0_48 = arith.constant 0 : index
    %c0_49 = arith.constant 0 : index
    %78 = vector.load %arg4[%c3, %c0_47, %c0_48, %c0_49] : memref<8x2x32x32xbf16, #tpu.memory_space<vmem>>, vector<1x1x32x32xbf16>
    %79 = vector.shape_cast %78 : vector<1x1x32x32xbf16> to vector<32x32xbf16>
    %80 = vector.extract_strided_slice %0 {offsets = [0, 8], sizes = [32, 1], strides = [1, 1]} : vector<80x19xf32> to vector<32x1xf32>
    %81 = arith.truncf %77 : vector<32x64xf32> to vector<32x64xbf16>
    %cst_50 = arith.constant dense<0.000000e+00> : vector<32x64xf32>
    %82 = tpu.matmul %79, %81, %cst_50 {dimension_numbers = #tpu.dot_dimension_numbers<[1], [0], [0], [1], [0, 0, 1, 1], [], []>} : vector<32x32xbf16>, vector<32x64xbf16>, vector<32x64xf32> -> vector<32x64xf32>
    %83 = vector.broadcast %80 : vector<32x1xf32> to vector<32x64xf32>
    %84 = arith.addf %82, %83 : vector<32x64xf32>
    %cst_51 = arith.constant 0.000000e+00 : f32
    %85 = vector.broadcast %cst_51 : f32 to vector<32x64xf32>
    %86 = arith.maximumf %84, %85 : vector<32x64xf32>
    %c3_52 = arith.constant 3 : index
    %c1_53 = arith.constant 1 : index
    %c0_54 = arith.constant 0 : index
    %c0_55 = arith.constant 0 : index
    %87 = vector.load %arg4[%c3_52, %c1_53, %c0_54, %c0_55] : memref<8x2x32x32xbf16, #tpu.memory_space<vmem>>, vector<1x1x32x32xbf16>
    %88 = vector.shape_cast %87 : vector<1x1x32x32xbf16> to vector<32x32xbf16>
    %89 = vector.extract_strided_slice %0 {offsets = [0, 9], sizes = [32, 1], strides = [1, 1]} : vector<80x19xf32> to vector<32x1xf32>
    %90 = arith.truncf %86 : vector<32x64xf32> to vector<32x64xbf16>
    %cst_56 = arith.constant dense<0.000000e+00> : vector<32x64xf32>
    %91 = tpu.matmul %88, %90, %cst_56 {dimension_numbers = #tpu.dot_dimension_numbers<[1], [0], [0], [1], [0, 0, 1, 1], [], []>} : vector<32x32xbf16>, vector<32x64xbf16>, vector<32x64xf32> -> vector<32x64xf32>
    %92 = vector.broadcast %89 : vector<32x1xf32> to vector<32x64xf32>
    %93 = arith.addf %91, %92 : vector<32x64xf32>
    %cst_57 = arith.constant 0.000000e+00 : f32
    %94 = vector.broadcast %cst_57 : f32 to vector<32x64xf32>
    %95 = arith.maximumf %93, %94 : vector<32x64xf32>
    %96 = arith.addf %77, %95 : vector<32x64xf32>
    %97 = arith.truncf %96 : vector<32x64xf32> to vector<32x64xbf16>
    %98 = vector.extract_strided_slice %1 {offsets = [0, 0], sizes = [64, 32], strides = [1, 1]} : vector<256x128xbf16> to vector<64x32xbf16>
    %cst_58 = arith.constant dense<0.000000e+00> : vector<32x32xf32>
    %99 = tpu.matmul %97, %98, %cst_58 {dimension_numbers = #tpu.dot_dimension_numbers<[1], [0], [0], [1], [0, 0, 1, 1], [], []>} : vector<32x64xbf16>, vector<64x32xbf16>, vector<32x32xf32> -> vector<32x32xf32>
    %c4 = arith.constant 4 : index
    %c0_59 = arith.constant 0 : index
    %c0_60 = arith.constant 0 : index
    %c0_61 = arith.constant 0 : index
    %100 = vector.load %arg4[%c4, %c0_59, %c0_60, %c0_61] : memref<8x2x32x32xbf16, #tpu.memory_space<vmem>>, vector<1x1x32x32xbf16>
    %101 = vector.shape_cast %100 : vector<1x1x32x32xbf16> to vector<32x32xbf16>
    %102 = vector.extract_strided_slice %0 {offsets = [0, 10], sizes = [32, 1], strides = [1, 1]} : vector<80x19xf32> to vector<32x1xf32>
    %103 = arith.truncf %99 : vector<32x32xf32> to vector<32x32xbf16>
    %cst_62 = arith.constant dense<0.000000e+00> : vector<32x32xf32>
    %104 = tpu.matmul %101, %103, %cst_62 {dimension_numbers = #tpu.dot_dimension_numbers<[1], [0], [0], [1], [0, 0, 1, 1], [], []>} : vector<32x32xbf16>, vector<32x32xbf16>, vector<32x32xf32> -> vector<32x32xf32>
    %105 = vector.broadcast %102 : vector<32x1xf32> to vector<32x32xf32>
    %106 = arith.addf %104, %105 : vector<32x32xf32>
    %cst_63 = arith.constant 0.000000e+00 : f32
    %107 = vector.broadcast %cst_63 : f32 to vector<32x32xf32>
    %108 = arith.maximumf %106, %107 : vector<32x32xf32>
    %c4_64 = arith.constant 4 : index
    %c1_65 = arith.constant 1 : index
    %c0_66 = arith.constant 0 : index
    %c0_67 = arith.constant 0 : index
    %109 = vector.load %arg4[%c4_64, %c1_65, %c0_66, %c0_67] : memref<8x2x32x32xbf16, #tpu.memory_space<vmem>>, vector<1x1x32x32xbf16>
    %110 = vector.shape_cast %109 : vector<1x1x32x32xbf16> to vector<32x32xbf16>
    %111 = vector.extract_strided_slice %0 {offsets = [0, 11], sizes = [32, 1], strides = [1, 1]} : vector<80x19xf32> to vector<32x1xf32>
    %112 = arith.truncf %108 : vector<32x32xf32> to vector<32x32xbf16>
    %cst_68 = arith.constant dense<0.000000e+00> : vector<32x32xf32>
    %113 = tpu.matmul %110, %112, %cst_68 {dimension_numbers = #tpu.dot_dimension_numbers<[1], [0], [0], [1], [0, 0, 1, 1], [], []>} : vector<32x32xbf16>, vector<32x32xbf16>, vector<32x32xf32> -> vector<32x32xf32>
    %114 = vector.broadcast %111 : vector<32x1xf32> to vector<32x32xf32>
    %115 = arith.addf %113, %114 : vector<32x32xf32>
    %cst_69 = arith.constant 0.000000e+00 : f32
    %116 = vector.broadcast %cst_69 : f32 to vector<32x32xf32>
    %117 = arith.maximumf %115, %116 : vector<32x32xf32>
    %118 = arith.addf %99, %117 : vector<32x32xf32>
    %c5 = arith.constant 5 : index
    %c0_70 = arith.constant 0 : index
    %c0_71 = arith.constant 0 : index
    %c0_72 = arith.constant 0 : index
    %119 = vector.load %arg4[%c5, %c0_70, %c0_71, %c0_72] : memref<8x2x32x32xbf16, #tpu.memory_space<vmem>>, vector<1x1x32x32xbf16>
    %120 = vector.shape_cast %119 : vector<1x1x32x32xbf16> to vector<32x32xbf16>
    %121 = vector.extract_strided_slice %0 {offsets = [0, 12], sizes = [32, 1], strides = [1, 1]} : vector<80x19xf32> to vector<32x1xf32>
    %122 = arith.truncf %118 : vector<32x32xf32> to vector<32x32xbf16>
    %cst_73 = arith.constant dense<0.000000e+00> : vector<32x32xf32>
    %123 = tpu.matmul %120, %122, %cst_73 {dimension_numbers = #tpu.dot_dimension_numbers<[1], [0], [0], [1], [0, 0, 1, 1], [], []>} : vector<32x32xbf16>, vector<32x32xbf16>, vector<32x32xf32> -> vector<32x32xf32>
    %124 = vector.broadcast %121 : vector<32x1xf32> to vector<32x32xf32>
    %125 = arith.addf %123, %124 : vector<32x32xf32>
    %cst_74 = arith.constant 0.000000e+00 : f32
    %126 = vector.broadcast %cst_74 : f32 to vector<32x32xf32>
    %127 = arith.maximumf %125, %126 : vector<32x32xf32>
    %c5_75 = arith.constant 5 : index
    %c1_76 = arith.constant 1 : index
    %c0_77 = arith.constant 0 : index
    %c0_78 = arith.constant 0 : index
    %128 = vector.load %arg4[%c5_75, %c1_76, %c0_77, %c0_78] : memref<8x2x32x32xbf16, #tpu.memory_space<vmem>>, vector<1x1x32x32xbf16>
    %129 = vector.shape_cast %128 : vector<1x1x32x32xbf16> to vector<32x32xbf16>
    %130 = vector.extract_strided_slice %0 {offsets = [0, 13], sizes = [32, 1], strides = [1, 1]} : vector<80x19xf32> to vector<32x1xf32>
    %131 = arith.truncf %127 : vector<32x32xf32> to vector<32x32xbf16>
    %cst_79 = arith.constant dense<0.000000e+00> : vector<32x32xf32>
    %132 = tpu.matmul %129, %131, %cst_79 {dimension_numbers = #tpu.dot_dimension_numbers<[1], [0], [0], [1], [0, 0, 1, 1], [], []>} : vector<32x32xbf16>, vector<32x32xbf16>, vector<32x32xf32> -> vector<32x32xf32>
    %133 = vector.broadcast %130 : vector<32x1xf32> to vector<32x32xf32>
    %134 = arith.addf %132, %133 : vector<32x32xf32>
    %cst_80 = arith.constant 0.000000e+00 : f32
    %135 = vector.broadcast %cst_80 : f32 to vector<32x32xf32>
    %136 = arith.maximumf %134, %135 : vector<32x32xf32>
    %137 = arith.addf %118, %136 : vector<32x32xf32>
    %138 = arith.truncf %137 : vector<32x32xf32> to vector<32x32xbf16>
    %139 = vector.extract_strided_slice %1 {offsets = [0, 0], sizes = [32, 16], strides = [1, 1]} : vector<256x128xbf16> to vector<32x16xbf16>
    %cst_81 = arith.constant dense<0.000000e+00> : vector<32x16xf32>
    %140 = tpu.matmul %138, %139, %cst_81 {dimension_numbers = #tpu.dot_dimension_numbers<[1], [0], [0], [1], [0, 0, 1, 1], [], []>} : vector<32x32xbf16>, vector<32x16xbf16>, vector<32x16xf32> -> vector<32x16xf32>
    %c6 = arith.constant 6 : index
    %c0_82 = arith.constant 0 : index
    %c0_83 = arith.constant 0 : index
    %c0_84 = arith.constant 0 : index
    %141 = vector.load %arg4[%c6, %c0_82, %c0_83, %c0_84] : memref<8x2x32x32xbf16, #tpu.memory_space<vmem>>, vector<1x1x32x32xbf16>
    %142 = vector.shape_cast %141 : vector<1x1x32x32xbf16> to vector<32x32xbf16>
    %143 = vector.extract_strided_slice %0 {offsets = [0, 14], sizes = [32, 1], strides = [1, 1]} : vector<80x19xf32> to vector<32x1xf32>
    %144 = arith.truncf %140 : vector<32x16xf32> to vector<32x16xbf16>
    %cst_85 = arith.constant dense<0.000000e+00> : vector<32x16xf32>
    %145 = tpu.matmul %142, %144, %cst_85 {dimension_numbers = #tpu.dot_dimension_numbers<[1], [0], [0], [1], [0, 0, 1, 1], [], []>} : vector<32x32xbf16>, vector<32x16xbf16>, vector<32x16xf32> -> vector<32x16xf32>
    %146 = vector.broadcast %143 : vector<32x1xf32> to vector<32x16xf32>
    %147 = arith.addf %145, %146 : vector<32x16xf32>
    %cst_86 = arith.constant 0.000000e+00 : f32
    %148 = vector.broadcast %cst_86 : f32 to vector<32x16xf32>
    %149 = arith.maximumf %147, %148 : vector<32x16xf32>
    %c6_87 = arith.constant 6 : index
    %c1_88 = arith.constant 1 : index
    %c0_89 = arith.constant 0 : index
    %c0_90 = arith.constant 0 : index
    %150 = vector.load %arg4[%c6_87, %c1_88, %c0_89, %c0_90] : memref<8x2x32x32xbf16, #tpu.memory_space<vmem>>, vector<1x1x32x32xbf16>
    %151 = vector.shape_cast %150 : vector<1x1x32x32xbf16> to vector<32x32xbf16>
    %152 = vector.extract_strided_slice %0 {offsets = [0, 15], sizes = [32, 1], strides = [1, 1]} : vector<80x19xf32> to vector<32x1xf32>
    %153 = arith.truncf %149 : vector<32x16xf32> to vector<32x16xbf16>
    %cst_91 = arith.constant dense<0.000000e+00> : vector<32x16xf32>
    %154 = tpu.matmul %151, %153, %cst_91 {dimension_numbers = #tpu.dot_dimension_numbers<[1], [0], [0], [1], [0, 0, 1, 1], [], []>} : vector<32x32xbf16>, vector<32x16xbf16>, vector<32x16xf32> -> vector<32x16xf32>
    %155 = vector.broadcast %152 : vector<32x1xf32> to vector<32x16xf32>
    %156 = arith.addf %154, %155 : vector<32x16xf32>
    %cst_92 = arith.constant 0.000000e+00 : f32
    %157 = vector.broadcast %cst_92 : f32 to vector<32x16xf32>
    %158 = arith.maximumf %156, %157 : vector<32x16xf32>
    %159 = arith.addf %140, %158 : vector<32x16xf32>
    %c7 = arith.constant 7 : index
    %c0_93 = arith.constant 0 : index
    %c0_94 = arith.constant 0 : index
    %c0_95 = arith.constant 0 : index
    %160 = vector.load %arg4[%c7, %c0_93, %c0_94, %c0_95] : memref<8x2x32x32xbf16, #tpu.memory_space<vmem>>, vector<1x1x32x32xbf16>
    %161 = vector.shape_cast %160 : vector<1x1x32x32xbf16> to vector<32x32xbf16>
    %162 = vector.extract_strided_slice %0 {offsets = [0, 16], sizes = [32, 1], strides = [1, 1]} : vector<80x19xf32> to vector<32x1xf32>
    %163 = arith.truncf %159 : vector<32x16xf32> to vector<32x16xbf16>
    %cst_96 = arith.constant dense<0.000000e+00> : vector<32x16xf32>
    %164 = tpu.matmul %161, %163, %cst_96 {dimension_numbers = #tpu.dot_dimension_numbers<[1], [0], [0], [1], [0, 0, 1, 1], [], []>} : vector<32x32xbf16>, vector<32x16xbf16>, vector<32x16xf32> -> vector<32x16xf32>
    %165 = vector.broadcast %162 : vector<32x1xf32> to vector<32x16xf32>
    %166 = arith.addf %164, %165 : vector<32x16xf32>
    %cst_97 = arith.constant 0.000000e+00 : f32
    %167 = vector.broadcast %cst_97 : f32 to vector<32x16xf32>
    %168 = arith.maximumf %166, %167 : vector<32x16xf32>
    %c7_98 = arith.constant 7 : index
    %c1_99 = arith.constant 1 : index
    %c0_100 = arith.constant 0 : index
    %c0_101 = arith.constant 0 : index
    %169 = vector.load %arg4[%c7_98, %c1_99, %c0_100, %c0_101] : memref<8x2x32x32xbf16, #tpu.memory_space<vmem>>, vector<1x1x32x32xbf16>
    %170 = vector.shape_cast %169 : vector<1x1x32x32xbf16> to vector<32x32xbf16>
    %171 = vector.extract_strided_slice %0 {offsets = [0, 17], sizes = [32, 1], strides = [1, 1]} : vector<80x19xf32> to vector<32x1xf32>
    %172 = arith.truncf %168 : vector<32x16xf32> to vector<32x16xbf16>
    %cst_102 = arith.constant dense<0.000000e+00> : vector<32x16xf32>
    %173 = tpu.matmul %170, %172, %cst_102 {dimension_numbers = #tpu.dot_dimension_numbers<[1], [0], [0], [1], [0, 0, 1, 1], [], []>} : vector<32x32xbf16>, vector<32x16xbf16>, vector<32x16xf32> -> vector<32x16xf32>
    %174 = vector.broadcast %171 : vector<32x1xf32> to vector<32x16xf32>
    %175 = arith.addf %173, %174 : vector<32x16xf32>
    %cst_103 = arith.constant 0.000000e+00 : f32
    %176 = vector.broadcast %cst_103 : f32 to vector<32x16xf32>
    %177 = arith.maximumf %175, %176 : vector<32x16xf32>
    %178 = arith.addf %159, %177 : vector<32x16xf32>
    %c0_104 = arith.constant 0 : index
    %c0_105 = arith.constant 0 : index
    %179 = vector.load %arg8[%c0_104, %c0_105] : memref<16x8xf32, #tpu.memory_space<vmem>>, vector<16x8xf32>
    %cst_106 = arith.constant dense<0.000000e+00> : vector<32x8xf32>
    %180 = tpu.matmul %178, %179, %cst_106 {dimension_numbers = #tpu.dot_dimension_numbers<[1], [0], [0], [1], [0, 0, 1, 1], [], []>} : vector<32x16xf32>, vector<16x8xf32>, vector<32x8xf32> -> vector<32x8xf32>
    %c0_107 = arith.constant 0 : index
    %c0_108 = arith.constant 0 : index
    %181 = vector.load %arg5[%c0_107, %c0_108] : memref<3x32xf32, #tpu.memory_space<vmem>>, vector<3x32xf32>
    %cst_109 = arith.constant dense<0.000000e+00> : vector<3x8xf32>
    %182 = tpu.matmul %181, %180, %cst_109 {dimension_numbers = #tpu.dot_dimension_numbers<[1], [0], [0], [1], [0, 0, 1, 1], [], []>} : vector<3x32xf32>, vector<32x8xf32>, vector<3x8xf32> -> vector<3x8xf32>
    %183 = vector.extract_strided_slice %0 {offsets = [0, 18], sizes = [3, 1], strides = [1, 1]} : vector<80x19xf32> to vector<3x1xf32>
    %184 = vector.broadcast %183 : vector<3x1xf32> to vector<3x8xf32>
    %185 = arith.addf %182, %184 : vector<3x8xf32>
    %c0_110 = arith.constant 0 : index
    %c0_111 = arith.constant 0 : index
    %c0_112 = arith.constant 0 : index
    %186 = vector.load %arg9[%c0_110, %c0_111, %c0_112] : memref<1x3x8xf32, #tpu.memory_space<vmem>>, vector<1x3x8xf32>
    %187 = vector.shape_cast %186 : vector<1x3x8xf32> to vector<3x8xf32>
    %188 = vector.shape_cast %185 : vector<3x8xf32> to vector<1x3x8xf32>
    tpu.vector_store %arg9[%c0_110, %c0_111, %c0_112], %188 {strides = array<i32>} : memref<1x3x8xf32, #tpu.memory_space<vmem>>, vector<1x3x8xf32>,
    return
  }
  func.func @transform_0(%arg0: i32) -> (i32, i32) {
    %c0_i32 = arith.constant 0 : i32
    %c0_i32_0 = arith.constant 0 : i32
    return %c0_i32, %arg0 : i32, i32
  }
  func.func @transform_1(%arg0: i32) -> (i32, i32) {
    %c0_i32 = arith.constant 0 : i32
    %c0_i32_0 = arith.constant 0 : i32
    %c0_i32_1 = arith.constant 0 : i32
    return %c0_i32, %c0_i32_0 : i32, i32
  }
  func.func @transform_2(%arg0: i32) -> (i32, i32) {
    %c0_i32 = arith.constant 0 : i32
    %c0_i32_0 = arith.constant 0 : i32
    %c0_i32_1 = arith.constant 0 : i32
    return %c0_i32, %c0_i32_0 : i32, i32
  }
  func.func @transform_3(%arg0: i32) -> (i32, i32, i32, i32) {
    %c0_i32 = arith.constant 0 : i32
    %c0_i32_0 = arith.constant 0 : i32
    %c0_i32_1 = arith.constant 0 : i32
    %c0_i32_2 = arith.constant 0 : i32
    %c0_i32_3 = arith.constant 0 : i32
    return %c0_i32, %c0_i32_0, %c0_i32_1, %c0_i32_2 : i32, i32, i32, i32
  }
  func.func @transform_4(%arg0: i32) -> (i32, i32) {
    %c0_i32 = arith.constant 0 : i32
    %c0_i32_0 = arith.constant 0 : i32
    %c0_i32_1 = arith.constant 0 : i32
    return %c0_i32, %c0_i32_0 : i32, i32
  }
  func.func @transform_5(%arg0: i32) -> (i32, i32) {
    %c0_i32 = arith.constant 0 : i32
    %c0_i32_0 = arith.constant 0 : i32
    %c0_i32_1 = arith.constant 0 : i32
    return %c0_i32, %c0_i32_0 : i32, i32
  }
  func.func @transform_6(%arg0: i32) -> (i32, i32) {
    %c0_i32 = arith.constant 0 : i32
    %c0_i32_0 = arith.constant 0 : i32
    %c0_i32_1 = arith.constant 0 : i32
    return %c0_i32, %c0_i32_0 : i32, i32
  }
  func.func @transform_7(%arg0: i32) -> (i32, i32) {
    %c0_i32 = arith.constant 0 : i32
    %c0_i32_0 = arith.constant 0 : i32
    %c0_i32_1 = arith.constant 0 : i32
    return %c0_i32, %c0_i32_0 : i32, i32
  }
  func.func @transform_8(%arg0: i32) -> (i32, i32, i32) {
    %c0_i32 = arith.constant 0 : i32
    %c0_i32_0 = arith.constant 0 : i32
    %c0_i32_1 = arith.constant 0 : i32
    return %arg0, %c0_i32, %c0_i32_0 : i32, i32, i32
  }
}

</mosaic_0001>

<llo_original>
// kernel: tpu_custom_call.1
$region0: #{tpu_custom_call.1}
  #allocation0 [shape = 'u32[]', space=smem, size = 0x4, offset = 0x4, fixed_abs, tag = 'smem constant byte address 0x4 - core index']
  #allocation1 [shape = 'u32[144,128]{1,0:T(1,128)}', space=vmem, size = 0x12000, scoped, tag = 'internal scratch']
  %s0 = inlined_call_operand.hbm [shape: bf16[80,128], index: 0, kind: input, shape index: {}]
  %s1 = inlined_call_operand.hbm [shape: bf16[80,80], index: 1, kind: input, shape index: {}]
  %s2 = inlined_call_operand.hbm [shape: bf16[32,80], index: 2, kind: input, shape index: {}]
  %s3 = inlined_call_operand.hbm [shape: bf16[8,2,32,32], index: 3, kind: input, shape index: {}]
  %s4 = inlined_call_operand.vmem [shape: f32[3,32], index: 4, kind: input, shape index: {}]
  %s5 = inlined_call_operand.vmem [shape: f32[80,19], index: 5, kind: input, shape index: {}]
  %s6 = inlined_call_operand.vmem [shape: bf16[256,128], index: 6, kind: input, shape index: {}]
  %s7 = inlined_call_operand.vmem [shape: f32[16,8], index: 7, kind: input, shape index: {}]
  %s8 = inlined_call_operand.vmem [shape: f32[1,3,8], index: 8, kind: output, shape index: {}]
  %s9 = sld [smem:[#allocation0]]
  $region58: #{tpu_custom_call.1} parent=0
    _
  %s11 = ssub.s32 1, %s9
  %s12 = scalar_select 0, %s11, %s9
  $region1: #{tpu_custom_call.1} parent=0
    #allocation2 [shape = 'u8[20480]{0}', space=vmem, size = 0x5000, scoped, tag = 'input window, operand 0, single buffered']
    #allocation3 [shape = 's32[1]{0}', space=sflag, size = 0x4, scoped, tag = 'scoped memory for tpu_custom_call.1']
    #allocation4 [shape = 'u8[20480]{0}', space=vmem, size = 0x5000, scoped, tag = 'input window, operand 1, single buffered']
    #allocation5 [shape = 's32[1]{0}', space=sflag, size = 0x4, scoped, tag = 'scoped memory for tpu_custom_call.1']
    #allocation6 [shape = 'u8[8192]{0}', space=vmem, size = 0x2000, scoped, tag = 'input window, operand 2, single buffered']
    #allocation7 [shape = 'u8[131072]{0}', space=vmem, size = 0x20000, scoped, tag = 'input window, operand 3, single buffered']
    #allocation8 [shape = 's32[1]{0}', space=sflag, size = 0x4, scoped, tag = 'scoped memory for tpu_custom_call.1']
    %13 = vsyncpa [#allocation3], 0
    %14 = vsyncpa [#allocation5], 0
    %15 = vsyncpa [#allocation8], 0
    // Predicated region
    $region2: #{tpu_custom_call.1} parent=1 // pred_check
      _
    $region3: #{tpu_custom_call.1} parent=1 // pred_check_branch
      %17 = sbr.rel (0) target = $region5
    $region4: #{tpu_custom_call.1} parent=1 // pred_region
      %s19 = ssub.s32 640, 640
      %20 = vsyncadd [#allocation3], %s19
      %s21 = sshll.u32 [#allocation2], 4
      %s22 = int_to_ptr.vmem [resolvable:$true] %s21
      %27 = dma.hbm_to_vmem [thread:$0]  %s0, 640, %s22, [#allocation3], 64, 64, 4
    $region5: #{tpu_custom_call.1} parent=1 // pred_fallthru
      _
    // Predicated region
    $region6: #{tpu_custom_call.1} parent=1 // pred_check
      _
    $region7: #{tpu_custom_call.1} parent=1 // pred_check_branch
      %29 = sbr.rel (0) target = $region9
    $region8: #{tpu_custom_call.1} parent=1 // pred_region
      %s31 = ssub.s32 640, 640
      %32 = vsyncadd [#allocation5], %s31
      %s33 = sshll.u32 [#allocation4], 4
      %s34 = int_to_ptr.vmem [resolvable:$true] %s33
      %39 = dma.hbm_to_vmem [thread:$0]  %s1, 640, %s34, [#allocation5], 64, 64, 4
    $region9: #{tpu_custom_call.1} parent=1 // pred_fallthru
      _
    // Predicated region
    $region10: #{tpu_custom_call.1} parent=1 // pred_check
      _
    $region11: #{tpu_custom_call.1} parent=1 // pred_check_branch
      %41 = sbr.rel (0) target = $region13
    $region12: #{tpu_custom_call.1} parent=1 // pred_region
      %s43 = ssub.s32 256, 256
      %44 = vsyncadd [#allocation5], %s43
      %s45 = sshll.u32 [#allocation6], 4
      %s46 = int_to_ptr.vmem [resolvable:$true] %s45
      %51 = dma.hbm_to_vmem [thread:$0]  %s2, 256, %s46, [#allocation5], 64, 64, 4
    $region13: #{tpu_custom_call.1} parent=1 // pred_fallthru
      _
    // Predicated region
    $region14: #{tpu_custom_call.1} parent=1 // pred_check
      _
    $region15: #{tpu_custom_call.1} parent=1 // pred_check_branch
      %53 = sbr.rel (0) target = $region17
    $region16: #{tpu_custom_call.1} parent=1 // pred_region
      %s55 = ssub.s32 4096, 4096
      %56 = vsyncadd [#allocation8], %s55
      %s57 = sshll.u32 [#allocation7], 4
      %s58 = int_to_ptr.vmem [resolvable:$true] %s57
      %63 = dma.hbm_to_vmem [thread:$0]  %s3, 4096, %s58, [#allocation8], 64, 64, 4
    $region17: #{tpu_custom_call.1} parent=1 // pred_fallthru
      _
    // Predicated region
    $region18: #{tpu_custom_call.1} parent=1 // pred_check
      _
    $region19: #{tpu_custom_call.1} parent=1 // pred_check_branch
      %65 = sbr.rel (0) target = $region21
    $region20: #{tpu_custom_call.1} parent=1 // pred_region
      _
    $region21: #{tpu_custom_call.1} parent=1 // pred_fallthru
      _
    // Predicated region
    $region22: #{tpu_custom_call.1} parent=1 // pred_check
      _
    $region23: #{tpu_custom_call.1} parent=1 // pred_check_branch
      %67 = sbr.rel (0) target = $region25
    $region24: #{tpu_custom_call.1} parent=1 // pred_region
      _
    $region25: #{tpu_custom_call.1} parent=1 // pred_fallthru
      _
    // Predicated region
    $region26: #{tpu_custom_call.1} parent=1 // pred_check
      _
    $region27: #{tpu_custom_call.1} parent=1 // pred_check_branch
      %69 = sbr.rel (0) target = $region29
    $region28: #{tpu_custom_call.1} parent=1 // pred_region
      _
    $region29: #{tpu_custom_call.1} parent=1 // pred_fallthru
      _
    // Predicated region
    $region30: #{tpu_custom_call.1} parent=1 // pred_check
      _
    $region31: #{tpu_custom_call.1} parent=1 // pred_check_branch
      %71 = sbr.rel (0) target = $region33
    $region32: #{tpu_custom_call.1} parent=1 // pred_region
      _
    $region33: #{tpu_custom_call.1} parent=1 // pred_fallthru
      _
    // Predicated region
    $region34: #{tpu_custom_call.1} parent=1 // pred_check
      _
    $region35: #{tpu_custom_call.1} parent=1 // pred_check_branch
      %73 = sbr.rel (0) target = $region37
    $region36: #{tpu_custom_call.1} parent=1 // pred_region
      %74 = dma.done [#allocation3], 640
    $region37: #{tpu_custom_call.1} parent=1 // pred_fallthru
      _
    // Predicated region
    $region38: #{tpu_custom_call.1} parent=1 // pred_check
      _
    $region39: #{tpu_custom_call.1} parent=1 // pred_check_branch
      %76 = sbr.rel (0) target = $region41
    $region40: #{tpu_custom_call.1} parent=1 // pred_region
      %77 = dma.done [#allocation5], 640
    $region41: #{tpu_custom_call.1} parent=1 // pred_fallthru
      _
    // Predicated region
    $region42: #{tpu_custom_call.1} parent=1 // pred_check
      _
    $region43: #{tpu_custom_call.1} parent=1 // pred_check_branch
      %79 = sbr.rel (0) target = $region45
    $region44: #{tpu_custom_call.1} parent=1 // pred_region
      %80 = dma.done [#allocation5], 256
    $region45: #{tpu_custom_call.1} parent=1 // pred_fallthru
      _
    // Predicated region
    $region46: #{tpu_custom_call.1} parent=1 // pred_check
      _
    $region47: #{tpu_custom_call.1} parent=1 // pred_check_branch
      %82 = sbr.rel (0) target = $region49
    $region48: #{tpu_custom_call.1} parent=1 // pred_region
      %83 = dma.done [#allocation8], 4096
    $region49: #{tpu_custom_call.1} parent=1 // pred_fallthru
      _
    %v85 = vld [vmem:[%s5] sm:$0xff]
    %v86 = vld [vmem:[%s5 + $0x8] sm:$0xff]
    %v87 = vld [vmem:[%s5 + $0x10] sm:$0xff]
    %v88 = vld [vmem:[%s5 + $0x18] sm:$0xff]
    %v89 = vld [vmem:[%s5 + $0x20] sm:$0xff]
    %v90 = vld [vmem:[%s5 + $0x28] sm:$0xff]
    %v91 = vld [vmem:[%s5 + $0x30] sm:$0xff]
    %v92 = vld [vmem:[%s5 + $0x38] sm:$0xff]
    %v93 = vld [vmem:[%s5 + $0x40] sm:$0xff]
    %v94 = vld [vmem:[%s5 + $0x48] sm:$0xff]
    %v95 = vld [vmem:[%s6] sm:$0xf]
    %v96 = vld [vmem:[%s6 + $0x4] sm:$0xf]
    %v97 = vld [vmem:[%s6 + $0x8] sm:$0xf]
    %v98 = vld [vmem:[%s6 + $0xc] sm:$0xf]
    %v99 = vld [vmem:[%s6 + $0x10] sm:$0xf]
    %v100 = vld [vmem:[%s6 + $0x14] sm:$0xf]
    %v101 = vld [vmem:[%s6 + $0x18] sm:$0xf]
    %v102 = vld [vmem:[%s6 + $0x1c] sm:$0xf]
    %v103 = vld [vmem:[%s6 + $0x20] sm:$0xf]
    %v104 = vld [vmem:[%s6 + $0x24] sm:$0xf]
    %v105 = vld [vmem:[%s6 + $0x28] sm:$0xf]
    %v106 = vld [vmem:[%s6 + $0x2c] sm:$0xf]
    %v107 = vld [vmem:[%s6 + $0x30] sm:$0xf]
    %v108 = vld [vmem:[%s6 + $0x34] sm:$0xf]
    %v109 = vld [vmem:[%s6 + $0x38] sm:$0xf]
    %v110 = vld [vmem:[%s6 + $0x3c] sm:$0xf]
    %v111 = vld [vmem:[#allocation2] sm:$0xf]
    %v112 = vld [vmem:[#allocation2 + $0x4] sm:$0xf]
    %v113 = vld [vmem:[#allocation2 + $0x8] sm:$0xf]
    %v114 = vld [vmem:[#allocation2 + $0xc] sm:$0xf]
    %v115 = vld [vmem:[#allocation2 + $0x10] sm:$0xf]
    %v116 = vld [vmem:[#allocation2 + $0x14] sm:$0xf]
    %v117 = vld [vmem:[#allocation2 + $0x18] sm:$0xf]
    %v118 = vld [vmem:[#allocation2 + $0x1c] sm:$0xf]
    %v119 = vld [vmem:[#allocation2 + $0x20] sm:$0xf]
    %v120 = vld [vmem:[#allocation2 + $0x24] sm:$0xf]
    %v121 = vld [vmem:[#allocation4] sm:$0xf]
    %v122 = vld [vmem:[#allocation4 + $0x4] sm:$0xf]
    %v123 = vld [vmem:[#allocation4 + $0x8] sm:$0xf]
    %v124 = vld [vmem:[#allocation4 + $0xc] sm:$0xf]
    %v125 = vld [vmem:[#allocation4 + $0x10] sm:$0xf]
    %v126 = vld [vmem:[#allocation4 + $0x14] sm:$0xf]
    %v127 = vld [vmem:[#allocation4 + $0x18] sm:$0xf]
    %v128 = vld [vmem:[#allocation4 + $0x1c] sm:$0xf]
    %v129 = vld [vmem:[#allocation4 + $0x20] sm:$0xf]
    %v130 = vld [vmem:[#allocation4 + $0x24] sm:$0xf]
    %132 = vset.pattern.permute.xlu0 0
    %133 = vperm.xlu0 %132, %v85
    %v134 = vpop.permute.xlu0 %133
    %137 = vset.pattern.permute.xlu0 0
    %138 = vperm.xlu0 %137, %v86
    %v139 = vpop.permute.xlu0 %138
    %142 = vset.pattern.permute.xlu0 0
    %143 = vperm.xlu0 %142, %v87
    %v144 = vpop.permute.xlu0 %143
    %147 = vset.pattern.permute.xlu0 0
    %148 = vperm.xlu0 %147, %v88
    %v149 = vpop.permute.xlu0 %148
    %152 = vset.pattern.permute.xlu0 0
    %153 = vperm.xlu0 %152, %v89
    %v154 = vpop.permute.xlu0 %153
    %157 = vset.pattern.permute.xlu0 0
    %158 = vperm.xlu0 %157, %v90
    %v159 = vpop.permute.xlu0 %158
    %162 = vset.pattern.permute.xlu0 0
    %163 = vperm.xlu0 %162, %v91
    %v164 = vpop.permute.xlu0 %163
    %167 = vset.pattern.permute.xlu0 0
    %168 = vperm.xlu0 %167, %v92
    %v169 = vpop.permute.xlu0 %168
    %172 = vset.pattern.permute.xlu0 0
    %173 = vperm.xlu0 %172, %v93
    %v174 = vpop.permute.xlu0 %173
    %177 = vset.pattern.permute.xlu0 0
    %178 = vperm.xlu0 %177, %v94
    %v179 = vpop.permute.xlu0 %178
    %v191 = vunpack.c.l.b16 %v121
    %v192 = vunpack.c.l.b16 %v122
    %v193 = vunpack.c.l.b16 %v123
    %v194 = vunpack.c.l.b16 %v124
    %v195 = vunpack.c.l.b16 %v125
    %v196 = vunpack.c.l.b16 %v126
    %v197 = vunpack.c.l.b16 %v127
    %v198 = vunpack.c.l.b16 %v128
    %v199 = vunpack.c.l.b16 %v129
    %v200 = vunpack.c.l.b16 %v130
    %v201 = vpack.c.b16 %v192, %v191
    %v202 = vpack.c.b16 %v194, %v193
    %v203 = vpack.c.b16 %v196, %v195
    %v204 = vpack.c.b16 %v198, %v197
    %v205 = vpack.c.b16 %v200, %v199
    %v216 = vunpack.c.l.b16 %v111
    %v217 = vunpack.c.l.b16 %v112
    %v218 = vunpack.c.l.b16 %v113
    %v219 = vunpack.c.l.b16 %v114
    %v220 = vunpack.c.l.b16 %v115
    %v221 = vunpack.c.l.b16 %v116
    %v222 = vunpack.c.l.b16 %v117
    %v223 = vunpack.c.l.b16 %v118
    %v224 = vunpack.c.l.b16 %v119
    %v225 = vunpack.c.l.b16 %v120
    %v226 = vpack.c.b16 %v217, %v216
    %v227 = vpack.c.b16 %v219, %v218
    %v228 = vpack.c.b16 %v221, %v220
    %v229 = vpack.c.b16 %v223, %v222
    %v230 = vpack.c.b16 %v225, %v224
    %vm236 = vcmask 654336
    %v238 = vsel %vm236, %v201, 0
    %v241 = vsel %vm236, %v202, 0
    %v244 = vsel %vm236, %v203, 0
    %v247 = vsel %vm236, %v204, 0
    %v250 = vsel %vm236, %v205, 0
    %252 = vmatprep.subr.bf16.mxu0 0
    %253 = vmatpush1.bf16.msra.mxu0 0
    %254 = vmatprep.subr.bf16.mxu0 0
    %255 = vmatpush1.bf16.msra.mxu0 0
    %256 = vmatprep.subr.bf16.mxu0 0
    %257 = vmatpush1.bf16.msra.mxu0 0
    %258 = vmatprep.subr.bf16.mxu0 0
    %259 = vmatpush1.bf16.msra.mxu0 %v230
    %260 = vmatprep.subr.bf16.mxu0 0
    %261 = vmatpush1.bf16.msra.mxu0 %v229
    %262 = vmatprep.subr.bf16.mxu0 0
    %263 = vmatpush1.bf16.msra.mxu0 %v228
    %264 = vmatprep.subr.bf16.mxu0 0
    %265 = vmatpush1.bf16.msra.mxu0 %v227
    %266 = vmatprep.subr.bf16.mxu0 0
    %267 = vmatpush1.bf16.msra.mxu0 %v226
    %268 = vmatprep.subr.bf16.mxu0 0
    %269 = vmatpush2.bf16.msra.mxu0 0
    %270 = vmatprep.subr.bf16.mxu0 0
    %271 = vmatpush2.bf16.msra.mxu0 0
    %272 = vmatprep.subr.bf16.mxu0 0
    %273 = vmatpush2.bf16.msra.mxu0 0
    %274 = vmatprep.subr.bf16.mxu0 0
    %275 = vmatpush2.bf16.msra.mxu0 0
    %276 = vmatprep.subr.bf16.mxu0 0
    %277 = vmatpush2.bf16.msra.mxu0 0
    %278 = vmatprep.subr.bf16.mxu0 0
    %279 = vmatpush2.bf16.msra.mxu0 0
    %280 = vmatprep.subr.bf16.mxu0 0
    %281 = vmatpush2.bf16.msra.mxu0 0
    %282 = vmatprep.subr.bf16.mxu0 0
    %283 = vmatpush2.bf16.msra.mxu0 0
    %284 = vmatprep.mubr.bf16.mxu0 0
    %285 = vmatmul.mubr.bf16.gmra.mxu0 %v238
    %v286 = vpop.f32.mrf.mxu0
    %v287 = vadd.f32 %v134, %v286
    %v288 = vpop.f32.mrf.mxu0
    %v289 = vpop.f32.mrf.mxu0
    %v290 = vadd.f32 %v139, %v289
    %v291 = vpop.f32.mrf.mxu0
    %292 = vmatprep.mubr.bf16.mxu0 0
    %293 = vmatmul.mubr.bf16.gmra.mxu0 %v241
    %v294 = vpop.f32.mrf.mxu0
    %v295 = vadd.f32 %v144, %v294
    %v296 = vpop.f32.mrf.mxu0
    %v297 = vpop.f32.mrf.mxu0
    %v298 = vadd.f32 %v149, %v297
    %v299 = vpop.f32.mrf.mxu0
    %300 = vmatprep.mubr.bf16.mxu0 0
    %301 = vmatmul.mubr.bf16.gmra.mxu0 %v244
    %v302 = vpop.f32.mrf.mxu0
    %v303 = vadd.f32 %v154, %v302
    %v304 = vpop.f32.mrf.mxu0
    %v305 = vpop.f32.mrf.mxu0
    %v306 = vadd.f32 %v159, %v305
    %v307 = vpop.f32.mrf.mxu0
    %308 = vmatprep.mubr.bf16.mxu0 0
    %309 = vmatmul.mubr.bf16.gmra.mxu0 %v247
    %v310 = vpop.f32.mrf.mxu0
    %v311 = vadd.f32 %v164, %v310
    %v312 = vpop.f32.mrf.mxu0
    %v313 = vpop.f32.mrf.mxu0
    %v314 = vadd.f32 %v169, %v313
    %v315 = vpop.f32.mrf.mxu0
    %316 = vmatprep.mubr.bf16.mxu0 0
    %317 = vmatmul.mubr.bf16.gmra.mxu0 %v250
    %v318 = vpop.f32.mrf.mxu0
    %v319 = vadd.f32 %v174, %v318
    %v320 = vpop.f32.mrf.mxu0
    %v321 = vpop.f32.mrf.mxu0
    %v322 = vadd.f32 %v179, %v321
    %v323 = vpop.f32.mrf.mxu0
    %324 = vdwg.mxu0
    %v325 = vmax.f32 %v287, 0.0
    %v326 = vmax.f32 %v290, 0.0
    %v327 = vmax.f32 %v295, 0.0
    %v328 = vmax.f32 %v298, 0.0
    %v329 = vmax.f32 %v303, 0.0
    %v330 = vmax.f32 %v306, 0.0
    %v331 = vmax.f32 %v311, 0.0
    %v332 = vmax.f32 %v314, 0.0
    %v333 = vmax.f32 %v319, 0.0
    %v334 = vmax.f32 %v322, 0.0
    %v335 = vld [vmem:[#allocation6] sm:$0xf]
    %v336 = vld [vmem:[#allocation6 + $0x4] sm:$0xf]
    %v337 = vld [vmem:[#allocation6 + $0x8] sm:$0xf]
    %v338 = vld [vmem:[#allocation6 + $0xc] sm:$0xf]
    %v339 = vpack.c.bf16 %v326, %v325
    %v340 = vpack.c.bf16 %v328, %v327
    %v341 = vpack.c.bf16 %v330, %v329
    %v342 = vpack.c.bf16 %v332, %v331
    %v343 = vpack.c.bf16 %v334, %v333
    %344 = vset.pattern.permute.xlu0 1
    %345 = vperm.xlu0 %344, %v85
    %v346 = vpop.permute.xlu0 %345
    %348 = vset.pattern.permute.xlu0 1
    %349 = vperm.xlu0 %348, %v86
    %v350 = vpop.permute.xlu0 %349
    %352 = vset.pattern.permute.xlu0 1
    %353 = vperm.xlu0 %352, %v87
    %v354 = vpop.permute.xlu0 %353
    %356 = vset.pattern.permute.xlu0 1
    %357 = vperm.xlu0 %356, %v88
    %v358 = vpop.permute.xlu0 %357
    %v364 = vunpack.c.l.b16 %v335
    %v365 = vunpack.c.l.b16 %v336
    %v366 = vunpack.c.l.b16 %v337
    %v367 = vunpack.c.l.b16 %v338
    %v368 = vpack.c.b16 %v365, %v364
    %v369 = vpack.c.b16 %v367, %v366
    %v371 = vsel %vm236, %v368, 0
    %v374 = vsel %vm236, %v369, 0
    %376 = vmatprep.subr.bf16.mxu0 0
    %377 = vmatpush1.bf16.msra.mxu0 0
    %378 = vmatprep.subr.bf16.mxu0 0
    %379 = vmatpush1.bf16.msra.mxu0 0
    %380 = vmatprep.subr.bf16.mxu0 0
    %381 = vmatpush1.bf16.msra.mxu0 0
    %382 = vmatprep.subr.bf16.mxu0 0
    %383 = vmatpush1.bf16.msra.mxu0 %v343
    %384 = vmatprep.subr.bf16.mxu0 0
    %385 = vmatpush1.bf16.msra.mxu0 %v342
    %386 = vmatprep.subr.bf16.mxu0 0
    %387 = vmatpush1.bf16.msra.mxu0 %v341
    %388 = vmatprep.subr.bf16.mxu0 0
    %389 = vmatpush1.bf16.msra.mxu0 %v340
    %390 = vmatprep.subr.bf16.mxu0 0
    %391 = vmatpush1.bf16.msra.mxu0 %v339
    %392 = vmatprep.subr.bf16.mxu0 0
    %393 = vmatpush2.bf16.msra.mxu0 0
    %394 = vmatprep.subr.bf16.mxu0 0
    %395 = vmatpush2.bf16.msra.mxu0 0
    %396 = vmatprep.subr.bf16.mxu0 0
    %397 = vmatpush2.bf16.msra.mxu0 0
    %398 = vmatprep.subr.bf16.mxu0 0
    %399 = vmatpush2.bf16.msra.mxu0 0
    %400 = vmatprep.subr.bf16.mxu0 0
    %401 = vmatpush2.bf16.msra.mxu0 0
    %402 = vmatprep.subr.bf16.mxu0 0
    %403 = vmatpush2.bf16.msra.mxu0 0
    %404 = vmatprep.subr.bf16.mxu0 0
    %405 = vmatpush2.bf16.msra.mxu0 0
    %406 = vmatprep.subr.bf16.mxu0 0
    %407 = vmatpush2.bf16.msra.mxu0 0
    %408 = vmatprep.mubr.bf16.mxu0 0
    %409 = vmatmul.mubr.bf16.gmra.mxu0 %v371
    %v410 = vpop.f32.mrf.mxu0
    %v411 = vadd.f32 %v346, %v410
    %v412 = vpop.f32.mrf.mxu0
    %v413 = vpop.f32.mrf.mxu0
    %v414 = vadd.f32 %v350, %v413
    %v415 = vpop.f32.mrf.mxu0
    %416 = vmatprep.mubr.bf16.mxu0 0
    %417 = vmatmul.mubr.bf16.gmra.mxu0 %v374
    %v418 = vpop.f32.mrf.mxu0
    %v419 = vadd.f32 %v354, %v418
    %v420 = vpop.f32.mrf.mxu0
    %v421 = vpop.f32.mrf.mxu0
    %v422 = vadd.f32 %v358, %v421
    %v423 = vpop.f32.mrf.mxu0
    %424 = vdwg.mxu0
    %v425 = vmax.f32 %v411, 0.0
    %v426 = vmax.f32 %v414, 0.0
    %v427 = vmax.f32 %v419, 0.0
    %v428 = vmax.f32 %v422, 0.0
    %v429 = vld [vmem:[#allocation7] sm:$0xf]
    %v430 = vld [vmem:[#allocation7 + $0x4] sm:$0xf]
    %v431 = vld [vmem:[#allocation7 + $0x8] sm:$0xf]
    %v432 = vld [vmem:[#allocation7 + $0xc] sm:$0xf]
    %v433 = vpack.c.bf16 %v426, %v425
    %v434 = vpack.c.bf16 %v428, %v427
    %435 = vset.pattern.permute.xlu0 2
    %436 = vperm.xlu0 %435, %v85
    %v437 = vpop.permute.xlu0 %436
    %439 = vset.pattern.permute.xlu0 2
    %440 = vperm.xlu0 %439, %v86
    %v441 = vpop.permute.xlu0 %440
    %443 = vset.pattern.permute.xlu0 2
    %444 = vperm.xlu0 %443, %v87
    %v445 = vpop.permute.xlu0 %444
    %447 = vset.pattern.permute.xlu0 2
    %448 = vperm.xlu0 %447, %v88
    %v449 = vpop.permute.xlu0 %448
    %v455 = vunpack.c.l.b16 %v429
    %v456 = vunpack.c.l.b16 %v430
    %v457 = vunpack.c.l.b16 %v431
    %v458 = vunpack.c.l.b16 %v432
    %v459 = vpack.c.b16 %v456, %v455
    %v460 = vpack.c.b16 %v458, %v457
    %vm461 = vcmask 261120
    %v463 = vsel %vm461, %v459, 0
    %v466 = vsel %vm461, %v460, 0
    %468 = vmatprep.subr.bf16.mxu0 0
    %469 = vmatpush1.bf16.msra.mxu0 0
    %470 = vmatprep.subr.bf16.mxu0 0
    %471 = vmatpush1.bf16.msra.mxu0 0
    %472 = vmatprep.subr.bf16.mxu0 0
    %473 = vmatpush1.bf16.msra.mxu0 0
    %474 = vmatprep.subr.bf16.mxu0 0
    %475 = vmatpush1.bf16.msra.mxu0 0
    %476 = vmatprep.subr.bf16.mxu0 0
    %477 = vmatpush1.bf16.msra.mxu0 0
    %478 = vmatprep.subr.bf16.mxu0 0
    %479 = vmatpush1.bf16.msra.mxu0 0
    %480 = vmatprep.subr.bf16.mxu0 0
    %481 = vmatpush1.bf16.msra.mxu0 %v434
    %482 = vmatprep.subr.bf16.mxu0 0
    %483 = vmatpush1.bf16.msra.mxu0 %v433
    %484 = vmatprep.subr.bf16.mxu0 0
    %485 = vmatpush2.bf16.msra.mxu0 0
    %486 = vmatprep.subr.bf16.mxu0 0
    %487 = vmatpush2.bf16.msra.mxu0 0
    %488 = vmatprep.subr.bf16.mxu0 0
    %489 = vmatpush2.bf16.msra.mxu0 0
    %490 = vmatprep.subr.bf16.mxu0 0
    %491 = vmatpush2.bf16.msra.mxu0 0
    %492 = vmatprep.subr.bf16.mxu0 0
    %493 = vmatpush2.bf16.msra.mxu0 0
    %494 = vmatprep.subr.bf16.mxu0 0
    %495 = vmatpush2.bf16.msra.mxu0 0
    %496 = vmatprep.subr.bf16.mxu0 0
    %497 = vmatpush2.bf16.msra.mxu0 0
    %498 = vmatprep.subr.bf16.mxu0 0
    %499 = vmatpush2.bf16.msra.mxu0 0
    %500 = vmatprep.mubr.bf16.mxu0 0
    %501 = vmatmul.mubr.bf16.gmra.mxu0 %v463
    %v502 = vpop.f32.mrf.mxu0
    %v503 = vadd.f32 %v437, %v502
    %v504 = vpop.f32.mrf.mxu0
    %v505 = vpop.f32.mrf.mxu0
    %v506 = vadd.f32 %v441, %v505
    %v507 = vpop.f32.mrf.mxu0
    %508 = vmatprep.mubr.bf16.mxu0 0
    %509 = vmatmul.mubr.bf16.gmra.mxu0 %v466
    %v510 = vpop.f32.mrf.mxu0
    %v511 = vadd.f32 %v445, %v510
    %v512 = vpop.f32.mrf.mxu0
    %v513 = vpop.f32.mrf.mxu0
    %v514 = vadd.f32 %v449, %v513
    %v515 = vpop.f32.mrf.mxu0
    %516 = vdwg.mxu0
    %v517 = vmax.f32 %v503, 0.0
    %v518 = vmax.f32 %v506, 0.0
    %v519 = vmax.f32 %v511, 0.0
    %v520 = vmax.f32 %v514, 0.0
    %s521 = scalar_lea.vmem [#allocation7], 16
    %v522 = vld [vmem:[%s521] sm:$0xf]
    %v523 = vld [vmem:[%s521 + $0x4] sm:$0xf]
    %v524 = vld [vmem:[%s521 + $0x8] sm:$0xf]
    %v525 = vld [vmem:[%s521 + $0xc] sm:$0xf]
    %v526 = vpack.c.bf16 %v518, %v517
    %v527 = vpack.c.bf16 %v520, %v519
    %528 = vset.pattern.permute.xlu0 3
    %529 = vperm.xlu0 %528, %v85
    %v530 = vpop.permute.xlu0 %529
    %532 = vset.pattern.permute.xlu0 3
    %533 = vperm.xlu0 %532, %v86
    %v534 = vpop.permute.xlu0 %533
    %536 = vset.pattern.permute.xlu0 3
    %537 = vperm.xlu0 %536, %v87
    %v538 = vpop.permute.xlu0 %537
    %540 = vset.pattern.permute.xlu0 3
    %541 = vperm.xlu0 %540, %v88
    %v542 = vpop.permute.xlu0 %541
    %v548 = vunpack.c.l.b16 %v522
    %v549 = vunpack.c.l.b16 %v523
    %v550 = vunpack.c.l.b16 %v524
    %v551 = vunpack.c.l.b16 %v525
    %v552 = vpack.c.b16 %v549, %v548
    %v553 = vpack.c.b16 %v551, %v550
    %v555 = vsel %vm461, %v552, 0
    %v558 = vsel %vm461, %v553, 0
    %560 = vmatprep.subr.bf16.mxu0 0
    %561 = vmatpush1.bf16.msra.mxu0 0
    %562 = vmatprep.subr.bf16.mxu0 0
    %563 = vmatpush1.bf16.msra.mxu0 0
    %564 = vmatprep.subr.bf16.mxu0 0
    %565 = vmatpush1.bf16.msra.mxu0 0
    %566 = vmatprep.subr.bf16.mxu0 0
    %567 = vmatpush1.bf16.msra.mxu0 0
    %568 = vmatprep.subr.bf16.mxu0 0
    %569 = vmatpush1.bf16.msra.mxu0 0
    %570 = vmatprep.subr.bf16.mxu0 0
    %571 = vmatpush1.bf16.msra.mxu0 0
    %572 = vmatprep.subr.bf16.mxu0 0
    %573 = vmatpush1.bf16.msra.mxu0 %v527
    %574 = vmatprep.subr.bf16.mxu0 0
    %575 = vmatpush1.bf16.msra.mxu0 %v526
    %576 = vmatprep.subr.bf16.mxu0 0
    %577 = vmatpush2.bf16.msra.mxu0 0
    %578 = vmatprep.subr.bf16.mxu0 0
    %579 = vmatpush2.bf16.msra.mxu0 0
    %580 = vmatprep.subr.bf16.mxu0 0
    %581 = vmatpush2.bf16.msra.mxu0 0
    %582 = vmatprep.subr.bf16.mxu0 0
    %583 = vmatpush2.bf16.msra.mxu0 0
    %584 = vmatprep.subr.bf16.mxu0 0
    %585 = vmatpush2.bf16.msra.mxu0 0
    %586 = vmatprep.subr.bf16.mxu0 0
    %587 = vmatpush2.bf16.msra.mxu0 0
    %588 = vmatprep.subr.bf16.mxu0 0
    %589 = vmatpush2.bf16.msra.mxu0 0
    %590 = vmatprep.subr.bf16.mxu0 0
    %591 = vmatpush2.bf16.msra.mxu0 0
    %592 = vmatprep.mubr.bf16.mxu0 0
    %593 = vmatmul.mubr.bf16.gmra.mxu0 %v555
    %v594 = vpop.f32.mrf.mxu0
    %v595 = vadd.f32 %v530, %v594
    %v596 = vpop.f32.mrf.mxu0
    %v597 = vpop.f32.mrf.mxu0
    %v598 = vadd.f32 %v534, %v597
    %v599 = vpop.f32.mrf.mxu0
    %600 = vmatprep.mubr.bf16.mxu0 0
    %601 = vmatmul.mubr.bf16.gmra.mxu0 %v558
    %v602 = vpop.f32.mrf.mxu0
    %v603 = vadd.f32 %v538, %v602
    %v604 = vpop.f32.mrf.mxu0
    %v605 = vpop.f32.mrf.mxu0
    %v606 = vadd.f32 %v542, %v605
    %v607 = vpop.f32.mrf.mxu0
    %608 = vdwg.mxu0
    %v609 = vmax.f32 %v595, 0.0
    %v610 = vmax.f32 %v598, 0.0
    %v611 = vmax.f32 %v603, 0.0
    %v612 = vmax.f32 %v606, 0.0
    %v613 = vadd.f32 %v425, %v609
    %v614 = vadd.f32 %v426, %v610
    %v615 = vadd.f32 %v427, %v611
    %v616 = vadd.f32 %v428, %v612
    %s617 = scalar_lea.vmem [#allocation7], 32
    %v618 = vld [vmem:[%s617] sm:$0xf]
    %v619 = vld [vmem:[%s617 + $0x4] sm:$0xf]
    %v620 = vld [vmem:[%s617 + $0x8] sm:$0xf]
    %v621 = vld [vmem:[%s617 + $0xc] sm:$0xf]
    %v622 = vpack.c.bf16 %v614, %v613
    %v623 = vpack.c.bf16 %v616, %v615
    %624 = vset.pattern.permute.xlu0 4
    %625 = vperm.xlu0 %624, %v85
    %v626 = vpop.permute.xlu0 %625
    %628 = vset.pattern.permute.xlu0 4
    %629 = vperm.xlu0 %628, %v86
    %v630 = vpop.permute.xlu0 %629
    %632 = vset.pattern.permute.xlu0 4
    %633 = vperm.xlu0 %632, %v87
    %v634 = vpop.permute.xlu0 %633
    %636 = vset.pattern.permute.xlu0 4
    %637 = vperm.xlu0 %636, %v88
    %v638 = vpop.permute.xlu0 %637
    %v644 = vunpack.c.l.b16 %v618
    %v645 = vunpack.c.l.b16 %v619
    %v646 = vunpack.c.l.b16 %v620
    %v647 = vunpack.c.l.b16 %v621
    %v648 = vpack.c.b16 %v645, %v644
    %v649 = vpack.c.b16 %v647, %v646
    %v651 = vsel %vm461, %v648, 0
    %v654 = vsel %vm461, %v649, 0
    %656 = vmatprep.subr.bf16.mxu0 0
    %657 = vmatpush1.bf16.msra.mxu0 0
    %658 = vmatprep.subr.bf16.mxu0 0
    %659 = vmatpush1.bf16.msra.mxu0 0
    %660 = vmatprep.subr.bf16.mxu0 0
    %661 = vmatpush1.bf16.msra.mxu0 0
    %662 = vmatprep.subr.bf16.mxu0 0
    %663 = vmatpush1.bf16.msra.mxu0 0
    %664 = vmatprep.subr.bf16.mxu0 0
    %665 = vmatpush1.bf16.msra.mxu0 0
    %666 = vmatprep.subr.bf16.mxu0 0
    %667 = vmatpush1.bf16.msra.mxu0 0
    %668 = vmatprep.subr.bf16.mxu0 0
    %669 = vmatpush1.bf16.msra.mxu0 %v623
    %670 = vmatprep.subr.bf16.mxu0 0
    %671 = vmatpush1.bf16.msra.mxu0 %v622
    %672 = vmatprep.subr.bf16.mxu0 0
    %673 = vmatpush2.bf16.msra.mxu0 0
    %674 = vmatprep.subr.bf16.mxu0 0
    %675 = vmatpush2.bf16.msra.mxu0 0
    %676 = vmatprep.subr.bf16.mxu0 0
    %677 = vmatpush2.bf16.msra.mxu0 0
    %678 = vmatprep.subr.bf16.mxu0 0
    %679 = vmatpush2.bf16.msra.mxu0 0
    %680 = vmatprep.subr.bf16.mxu0 0
    %681 = vmatpush2.bf16.msra.mxu0 0
    %682 = vmatprep.subr.bf16.mxu0 0
    %683 = vmatpush2.bf16.msra.mxu0 0
    %684 = vmatprep.subr.bf16.mxu0 0
    %685 = vmatpush2.bf16.msra.mxu0 0
    %686 = vmatprep.subr.bf16.mxu0 0
    %687 = vmatpush2.bf16.msra.mxu0 0
    %688 = vmatprep.mubr.bf16.mxu0 0
    %689 = vmatmul.mubr.bf16.gmra.mxu0 %v651
    %v690 = vpop.f32.mrf.mxu0
    %v691 = vadd.f32 %v626, %v690
    %v692 = vpop.f32.mrf.mxu0
    %v693 = vpop.f32.mrf.mxu0
    %v694 = vadd.f32 %v630, %v693
    %v695 = vpop.f32.mrf.mxu0
    %696 = vmatprep.mubr.bf16.mxu0 0
    %697 = vmatmul.mubr.bf16.gmra.mxu0 %v654
    %v698 = vpop.f32.mrf.mxu0
    %v699 = vadd.f32 %v634, %v698
    %v700 = vpop.f32.mrf.mxu0
    %v701 = vpop.f32.mrf.mxu0
    %v702 = vadd.f32 %v638, %v701
    %v703 = vpop.f32.mrf.mxu0
    %704 = vdwg.mxu0
    %v705 = vmax.f32 %v691, 0.0
    %v706 = vmax.f32 %v694, 0.0
    %v707 = vmax.f32 %v699, 0.0
    %v708 = vmax.f32 %v702, 0.0
    %s709 = scalar_lea.vmem [#allocation7], 48
    %v710 = vld [vmem:[%s709] sm:$0xf]
    %v711 = vld [vmem:[%s709 + $0x4] sm:$0xf]
    %v712 = vld [vmem:[%s709 + $0x8] sm:$0xf]
    %v713 = vld [vmem:[%s709 + $0xc] sm:$0xf]
    %v714 = vpack.c.bf16 %v706, %v705
    %v715 = vpack.c.bf16 %v708, %v707
    %716 = vset.pattern.permute.xlu0 5
    %717 = vperm.xlu0 %716, %v85
    %v718 = vpop.permute.xlu0 %717
    %720 = vset.pattern.permute.xlu0 5
    %721 = vperm.xlu0 %720, %v86
    %v722 = vpop.permute.xlu0 %721
    %724 = vset.pattern.permute.xlu0 5
    %725 = vperm.xlu0 %724, %v87
    %v726 = vpop.permute.xlu0 %725
    %728 = vset.pattern.permute.xlu0 5
    %729 = vperm.xlu0 %728, %v88
    %v730 = vpop.permute.xlu0 %729
    %v736 = vunpack.c.l.b16 %v710
    %v737 = vunpack.c.l.b16 %v711
    %v738 = vunpack.c.l.b16 %v712
    %v739 = vunpack.c.l.b16 %v713
    %v740 = vpack.c.b16 %v737, %v736
    %v741 = vpack.c.b16 %v739, %v738
    %v743 = vsel %vm461, %v740, 0
    %v746 = vsel %vm461, %v741, 0
    %748 = vmatprep.subr.bf16.mxu0 0
    %749 = vmatpush1.bf16.msra.mxu0 0
    %750 = vmatprep.subr.bf16.mxu0 0
    %751 = vmatpush1.bf16.msra.mxu0 0
    %752 = vmatprep.subr.bf16.mxu0 0
    %753 = vmatpush1.bf16.msra.mxu0 0
    %754 = vmatprep.subr.bf16.mxu0 0
    %755 = vmatpush1.bf16.msra.mxu0 0
    %756 = vmatprep.subr.bf16.mxu0 0
    %757 = vmatpush1.bf16.msra.mxu0 0
    %758 = vmatprep.subr.bf16.mxu0 0
    %759 = vmatpush1.bf16.msra.mxu0 0
    %760 = vmatprep.subr.bf16.mxu0 0
    %761 = vmatpush1.bf16.msra.mxu0 %v715
    %762 = vmatprep.subr.bf16.mxu0 0
    %763 = vmatpush1.bf16.msra.mxu0 %v714
    %764 = vmatprep.subr.bf16.mxu0 0
    %765 = vmatpush2.bf16.msra.mxu0 0
    %766 = vmatprep.subr.bf16.mxu0 0
    %767 = vmatpush2.bf16.msra.mxu0 0
    %768 = vmatprep.subr.bf16.mxu0 0
    %769 = vmatpush2.bf16.msra.mxu0 0
    %770 = vmatprep.subr.bf16.mxu0 0
    %771 = vmatpush2.bf16.msra.mxu0 0
    %772 = vmatprep.subr.bf16.mxu0 0
    %773 = vmatpush2.bf16.msra.mxu0 0
    %774 = vmatprep.subr.bf16.mxu0 0
    %775 = vmatpush2.bf16.msra.mxu0 0
    %776 = vmatprep.subr.bf16.mxu0 0
    %777 = vmatpush2.bf16.msra.mxu0 0
    %778 = vmatprep.subr.bf16.mxu0 0
    %779 = vmatpush2.bf16.msra.mxu0 0
    %780 = vmatprep.mubr.bf16.mxu0 0
    %781 = vmatmul.mubr.bf16.gmra.mxu0 %v743
    %v782 = vpop.f32.mrf.mxu0
    %v783 = vadd.f32 %v718, %v782
    %v784 = vpop.f32.mrf.mxu0
    %v785 = vpop.f32.mrf.mxu0
    %v786 = vadd.f32 %v722, %v785
    %v787 = vpop.f32.mrf.mxu0
    %788 = vmatprep.mubr.bf16.mxu0 0
    %789 = vmatmul.mubr.bf16.gmra.mxu0 %v746
    %v790 = vpop.f32.mrf.mxu0
    %v791 = vadd.f32 %v726, %v790
    %v792 = vpop.f32.mrf.mxu0
    %v793 = vpop.f32.mrf.mxu0
    %v794 = vadd.f32 %v730, %v793
    %v795 = vpop.f32.mrf.mxu0
    %796 = vdwg.mxu0
    %v797 = vmax.f32 %v783, 0.0
    %v798 = vmax.f32 %v786, 0.0
    %v799 = vmax.f32 %v791, 0.0
    %v800 = vmax.f32 %v794, 0.0
    %v801 = vadd.f32 %v613, %v797
    %v802 = vadd.f32 %v614, %v798
    %v803 = vadd.f32 %v615, %v799
    %v804 = vadd.f32 %v616, %v800
    %v805 = vpack.c.bf16 %v802, %v801
    %v806 = vpack.c.bf16 %v804, %v803
    %v823 = vunpack.c.l.b16 %v95
    %v824 = vunpack.c.l.b16 %v96
    %v825 = vunpack.c.l.b16 %v97
    %v826 = vunpack.c.l.b16 %v98
    %v827 = vunpack.c.l.b16 %v99
    %v828 = vunpack.c.l.b16 %v100
    %v829 = vunpack.c.l.b16 %v101
    %v830 = vunpack.c.l.b16 %v102
    %v831 = vunpack.c.l.b16 %v103
    %v832 = vunpack.c.l.b16 %v104
    %v833 = vunpack.c.l.b16 %v105
    %v834 = vunpack.c.l.b16 %v106
    %v835 = vunpack.c.l.b16 %v107
    %v836 = vunpack.c.l.b16 %v108
    %v837 = vunpack.c.l.b16 %v109
    %v838 = vunpack.c.l.b16 %v110
    %v839 = vpack.c.b16 %v824, %v823
    %v840 = vpack.c.b16 %v826, %v825
    %v841 = vpack.c.b16 %v828, %v827
    %v842 = vpack.c.b16 %v830, %v829
    %v843 = vpack.c.b16 %v832, %v831
    %v844 = vpack.c.b16 %v834, %v833
    %v845 = vpack.c.b16 %v836, %v835
    %v846 = vpack.c.b16 %v838, %v837
    %855 = vmatprep.subr.bf16.mxu0 0
    %856 = vmatpush1.bf16.msra.mxu0 %v846
    %857 = vmatprep.subr.bf16.mxu0 0
    %858 = vmatpush1.bf16.msra.mxu0 %v845
    %859 = vmatprep.subr.bf16.mxu0 0
    %860 = vmatpush1.bf16.msra.mxu0 %v844
    %861 = vmatprep.subr.bf16.mxu0 0
    %862 = vmatpush1.bf16.msra.mxu0 %v843
    %863 = vmatprep.subr.bf16.mxu0 0
    %864 = vmatpush1.bf16.msra.mxu0 %v842
    %865 = vmatprep.subr.bf16.mxu0 0
    %866 = vmatpush1.bf16.msra.mxu0 %v841
    %867 = vmatprep.subr.bf16.mxu0 0
    %868 = vmatpush1.bf16.msra.mxu0 %v840
    %869 = vmatprep.subr.bf16.mxu0 0
    %870 = vmatpush1.bf16.msra.mxu0 %v839
    %871 = vmatprep.subr.bf16.mxu0 0
    %872 = vmatpush2.bf16.msra.mxu0 0
    %873 = vmatprep.subr.bf16.mxu0 0
    %874 = vmatpush2.bf16.msra.mxu0 0
    %875 = vmatprep.subr.bf16.mxu0 0
    %876 = vmatpush2.bf16.msra.mxu0 0
    %877 = vmatprep.subr.bf16.mxu0 0
    %878 = vmatpush2.bf16.msra.mxu0 0
    %879 = vmatprep.subr.bf16.mxu0 0
    %880 = vmatpush2.bf16.msra.mxu0 0
    %881 = vmatprep.subr.bf16.mxu0 0
    %882 = vmatpush2.bf16.msra.mxu0 0
    %883 = vmatprep.subr.bf16.mxu0 0
    %884 = vmatpush2.bf16.msra.mxu0 0
    %885 = vmatprep.subr.bf16.mxu0 0
    %886 = vmatpush2.bf16.msra.mxu0 0
    %887 = vmatprep.mubr.bf16.mxu0 0
    %888 = vmatmul.mubr.bf16.gmra.mxu0 %v805
    %v889 = vpop.f32.mrf.mxu0
    %v890 = vadd.f32 0.0, %v889
    %v891 = vpop.f32.mrf.mxu0
    %v892 = vpop.f32.mrf.mxu0
    %v893 = vadd.f32 0.0, %v892
    %v894 = vpop.f32.mrf.mxu0
    %895 = vmatprep.mubr.bf16.mxu0 0
    %896 = vmatmul.mubr.bf16.gmra.mxu0 %v806
    %v897 = vpop.f32.mrf.mxu0
    %v898 = vadd.f32 0.0, %v897
    %v899 = vpop.f32.mrf.mxu0
    %v900 = vpop.f32.mrf.mxu0
    %v901 = vadd.f32 0.0, %v900
    %v902 = vpop.f32.mrf.mxu0
    %903 = vdwg.mxu0
    %s904 = scalar_lea.vmem [#allocation7], 64
    %v905 = vld [vmem:[%s904] sm:$0xf]
    %v906 = vld [vmem:[%s904 + $0x4] sm:$0xf]
    %v907 = vld [vmem:[%s904 + $0x8] sm:$0xf]
    %v908 = vld [vmem:[%s904 + $0xc] sm:$0xf]
    %v909 = vpack.c.bf16 %v893, %v890
    %v910 = vpack.c.bf16 %v901, %v898
    %911 = vset.pattern.permute.xlu0 6
    %912 = vperm.xlu0 %911, %v85
    %v913 = vpop.permute.xlu0 %912
    %915 = vset.pattern.permute.xlu0 6
    %916 = vperm.xlu0 %915, %v86
    %v917 = vpop.permute.xlu0 %916
    %919 = vset.pattern.permute.xlu0 6
    %920 = vperm.xlu0 %919, %v87
    %v921 = vpop.permute.xlu0 %920
    %923 = vset.pattern.permute.xlu0 6
    %924 = vperm.xlu0 %923, %v88
    %v925 = vpop.permute.xlu0 %924
    %v931 = vunpack.c.l.b16 %v905
    %v932 = vunpack.c.l.b16 %v906
    %v933 = vunpack.c.l.b16 %v907
    %v934 = vunpack.c.l.b16 %v908
    %v935 = vpack.c.b16 %v932, %v931
    %v936 = vpack.c.b16 %v934, %v933
    %v938 = vsel %vm461, %v935, 0
    %v941 = vsel %vm461, %v936, 0
    %943 = vmatprep.subr.bf16.mxu0 0
    %944 = vmatpush1.bf16.msra.mxu0 0
    %945 = vmatprep.subr.bf16.mxu0 0
    %946 = vmatpush1.bf16.msra.mxu0 0
    %947 = vmatprep.subr.bf16.mxu0 0
    %948 = vmatpush1.bf16.msra.mxu0 0
    %949 = vmatprep.subr.bf16.mxu0 0
    %950 = vmatpush1.bf16.msra.mxu0 0
    %951 = vmatprep.subr.bf16.mxu0 0
    %952 = vmatpush1.bf16.msra.mxu0 0
    %953 = vmatprep.subr.bf16.mxu0 0
    %954 = vmatpush1.bf16.msra.mxu0 0
    %955 = vmatprep.subr.bf16.mxu0 0
    %956 = vmatpush1.bf16.msra.mxu0 %v910
    %957 = vmatprep.subr.bf16.mxu0 0
    %958 = vmatpush1.bf16.msra.mxu0 %v909
    %959 = vmatprep.subr.bf16.mxu0 0
    %960 = vmatpush2.bf16.msra.mxu0 0
    %961 = vmatprep.subr.bf16.mxu0 0
    %962 = vmatpush2.bf16.msra.mxu0 0
    %963 = vmatprep.subr.bf16.mxu0 0
    %964 = vmatpush2.bf16.msra.mxu0 0
    %965 = vmatprep.subr.bf16.mxu0 0
    %966 = vmatpush2.bf16.msra.mxu0 0
    %967 = vmatprep.subr.bf16.mxu0 0
    %968 = vmatpush2.bf16.msra.mxu0 0
    %969 = vmatprep.subr.bf16.mxu0 0
    %970 = vmatpush2.bf16.msra.mxu0 0
    %971 = vmatprep.subr.bf16.mxu0 0
    %972 = vmatpush2.bf16.msra.mxu0 0
    %973 = vmatprep.subr.bf16.mxu0 0
    %974 = vmatpush2.bf16.msra.mxu0 0
    %975 = vmatprep.mubr.bf16.mxu0 0
    %976 = vmatmul.mubr.bf16.gmra.mxu0 %v938
    %v977 = vpop.f32.mrf.mxu0
    %v978 = vadd.f32 %v913, %v977
    %v979 = vpop.f32.mrf.mxu0
    %v980 = vpop.f32.mrf.mxu0
    %v981 = vadd.f32 %v917, %v980
    %v982 = vpop.f32.mrf.mxu0
    %983 = vmatprep.mubr.bf16.mxu0 0
    %984 = vmatmul.mubr.bf16.gmra.mxu0 %v941
    %v985 = vpop.f32.mrf.mxu0
    %v986 = vadd.f32 %v921, %v985
    %v987 = vpop.f32.mrf.mxu0
    %v988 = vpop.f32.mrf.mxu0
    %v989 = vadd.f32 %v925, %v988
    %v990 = vpop.f32.mrf.mxu0
    %991 = vdwg.mxu0
    %v992 = vmax.f32 %v978, 0.0
    %v993 = vmax.f32 %v981, 0.0
    %v994 = vmax.f32 %v986, 0.0
    %v995 = vmax.f32 %v989, 0.0
    %s996 = scalar_lea.vmem [#allocation7], 80
    %v997 = vld [vmem:[%s996] sm:$0xf]
    %v998 = vld [vmem:[%s996 + $0x4] sm:$0xf]
    %v999 = vld [vmem:[%s996 + $0x8] sm:$0xf]
    %v1000 = vld [vmem:[%s996 + $0xc] sm:$0xf]
    %v1001 = vpack.c.bf16 %v993, %v992
    %v1002 = vpack.c.bf16 %v995, %v994
    %1003 = vset.pattern.permute.xlu0 7
    %1004 = vperm.xlu0 %1003, %v85
    %v1005 = vpop.permute.xlu0 %1004
    %1007 = vset.pattern.permute.xlu0 7
    %1008 = vperm.xlu0 %1007, %v86
    %v1009 = vpop.permute.xlu0 %1008
    %1011 = vset.pattern.permute.xlu0 7
    %1012 = vperm.xlu0 %1011, %v87
    %v1013 = vpop.permute.xlu0 %1012
    %1015 = vset.pattern.permute.xlu0 7
    %1016 = vperm.xlu0 %1015, %v88
    %v1017 = vpop.permute.xlu0 %1016
    %v1023 = vunpack.c.l.b16 %v997
    %v1024 = vunpack.c.l.b16 %v998
    %v1025 = vunpack.c.l.b16 %v999
    %v1026 = vunpack.c.l.b16 %v1000
    %v1027 = vpack.c.b16 %v1024, %v1023
    %v1028 = vpack.c.b16 %v1026, %v1025
    %v1030 = vsel %vm461, %v1027, 0
    %v1033 = vsel %vm461, %v1028, 0
    %1035 = vmatprep.subr.bf16.mxu0 0
    %1036 = vmatpush1.bf16.msra.mxu0 0
    %1037 = vmatprep.subr.bf16.mxu0 0
    %1038 = vmatpush1.bf16.msra.mxu0 0
    %1039 = vmatprep.subr.bf16.mxu0 0
    %1040 = vmatpush1.bf16.msra.mxu0 0
    %1041 = vmatprep.subr.bf16.mxu0 0
    %1042 = vmatpush1.bf16.msra.mxu0 0
    %1043 = vmatprep.subr.bf16.mxu0 0
    %1044 = vmatpush1.bf16.msra.mxu0 0
    %1045 = vmatprep.subr.bf16.mxu0 0
    %1046 = vmatpush1.bf16.msra.mxu0 0
    %1047 = vmatprep.subr.bf16.mxu0 0
    %1048 = vmatpush1.bf16.msra.mxu0 %v1002
    %1049 = vmatprep.subr.bf16.mxu0 0
    %1050 = vmatpush1.bf16.msra.mxu0 %v1001
    %1051 = vmatprep.subr.bf16.mxu0 0
    %1052 = vmatpush2.bf16.msra.mxu0 0
    %1053 = vmatprep.subr.bf16.mxu0 0
    %1054 = vmatpush2.bf16.msra.mxu0 0
    %1055 = vmatprep.subr.bf16.mxu0 0
    %1056 = vmatpush2.bf16.msra.mxu0 0
    %1057 = vmatprep.subr.bf16.mxu0 0
    %1058 = vmatpush2.bf16.msra.mxu0 0
    %1059 = vmatprep.subr.bf16.mxu0 0
    %1060 = vmatpush2.bf16.msra.mxu0 0
    %1061 = vmatprep.subr.bf16.mxu0 0
    %1062 = vmatpush2.bf16.msra.mxu0 0
    %1063 = vmatprep.subr.bf16.mxu0 0
    %1064 = vmatpush2.bf16.msra.mxu0 0
    %1065 = vmatprep.subr.bf16.mxu0 0
    %1066 = vmatpush2.bf16.msra.mxu0 0
    %1067 = vmatprep.mubr.bf16.mxu0 0
    %1068 = vmatmul.mubr.bf16.gmra.mxu0 %v1030
    %v1069 = vpop.f32.mrf.mxu0
    %v1070 = vadd.f32 %v1005, %v1069
    %v1071 = vpop.f32.mrf.mxu0
    %v1072 = vpop.f32.mrf.mxu0
    %v1073 = vadd.f32 %v1009, %v1072
    %v1074 = vpop.f32.mrf.mxu0
    %1075 = vmatprep.mubr.bf16.mxu0 0
    %1076 = vmatmul.mubr.bf16.gmra.mxu0 %v1033
    %v1077 = vpop.f32.mrf.mxu0
    %v1078 = vadd.f32 %v1013, %v1077
    %v1079 = vpop.f32.mrf.mxu0
    %v1080 = vpop.f32.mrf.mxu0
    %v1081 = vadd.f32 %v1017, %v1080
    %v1082 = vpop.f32.mrf.mxu0
    %1083 = vdwg.mxu0
    %v1084 = vmax.f32 %v1070, 0.0
    %v1085 = vmax.f32 %v1073, 0.0
    %v1086 = vmax.f32 %v1078, 0.0
    %v1087 = vmax.f32 %v1081, 0.0
    %v1088 = vadd.f32 %v890, %v1084
    %v1089 = vadd.f32 %v893, %v1085
    %v1090 = vadd.f32 %v898, %v1086
    %v1091 = vadd.f32 %v901, %v1087
    %s1092 = scalar_lea.vmem [#allocation7], 96
    %v1093 = vld [vmem:[%s1092] sm:$0xf]
    %v1094 = vld [vmem:[%s1092 + $0x4] sm:$0xf]
    %v1095 = vld [vmem:[%s1092 + $0x8] sm:$0xf]
    %v1096 = vld [vmem:[%s1092 + $0xc] sm:$0xf]
    %v1097 = vpack.c.bf16 %v1089, %v1088
    %v1098 = vpack.c.bf16 %v1091, %v1090
    %1099 = vset.pattern.permute.xlu0 8
    %1100 = vperm.xlu0 %1099, %v85
    %v1101 = vpop.permute.xlu0 %1100
    %1103 = vset.pattern.permute.xlu0 8
    %1104 = vperm.xlu0 %1103, %v86
    %v1105 = vpop.permute.xlu0 %1104
    %1107 = vset.pattern.permute.xlu0 8
    %1108 = vperm.xlu0 %1107, %v87
    %v1109 = vpop.permute.xlu0 %1108
    %1111 = vset.pattern.permute.xlu0 8
    %1112 = vperm.xlu0 %1111, %v88
    %v1113 = vpop.permute.xlu0 %1112
    %v1119 = vunpack.c.l.b16 %v1093
    %v1120 = vunpack.c.l.b16 %v1094
    %v1121 = vunpack.c.l.b16 %v1095
    %v1122 = vunpack.c.l.b16 %v1096
    %v1123 = vpack.c.b16 %v1120, %v1119
    %v1124 = vpack.c.b16 %v1122, %v1121
    %v1126 = vsel %vm461, %v1123, 0
    %v1129 = vsel %vm461, %v1124, 0
    %1131 = vmatprep.subr.bf16.mxu0 0
    %1132 = vmatpush1.bf16.msra.mxu0 0
    %1133 = vmatprep.subr.bf16.mxu0 0
    %1134 = vmatpush1.bf16.msra.mxu0 0
    %1135 = vmatprep.subr.bf16.mxu0 0
    %1136 = vmatpush1.bf16.msra.mxu0 0
    %1137 = vmatprep.subr.bf16.mxu0 0
    %1138 = vmatpush1.bf16.msra.mxu0 0
    %1139 = vmatprep.subr.bf16.mxu0 0
    %1140 = vmatpush1.bf16.msra.mxu0 0
    %1141 = vmatprep.subr.bf16.mxu0 0
    %1142 = vmatpush1.bf16.msra.mxu0 0
    %1143 = vmatprep.subr.bf16.mxu0 0
    %1144 = vmatpush1.bf16.msra.mxu0 %v1098
    %1145 = vmatprep.subr.bf16.mxu0 0
    %1146 = vmatpush1.bf16.msra.mxu0 %v1097
    %1147 = vmatprep.subr.bf16.mxu0 0
    %1148 = vmatpush2.bf16.msra.mxu0 0
    %1149 = vmatprep.subr.bf16.mxu0 0
    %1150 = vmatpush2.bf16.msra.mxu0 0
    %1151 = vmatprep.subr.bf16.mxu0 0
    %1152 = vmatpush2.bf16.msra.mxu0 0
    %1153 = vmatprep.subr.bf16.mxu0 0
    %1154 = vmatpush2.bf16.msra.mxu0 0
    %1155 = vmatprep.subr.bf16.mxu0 0
    %1156 = vmatpush2.bf16.msra.mxu0 0
    %1157 = vmatprep.subr.bf16.mxu0 0
    %1158 = vmatpush2.bf16.msra.mxu0 0
    %1159 = vmatprep.subr.bf16.mxu0 0
    %1160 = vmatpush2.bf16.msra.mxu0 0
    %1161 = vmatprep.subr.bf16.mxu0 0
    %1162 = vmatpush2.bf16.msra.mxu0 0
    %1163 = vmatprep.mubr.bf16.mxu0 0
    %1164 = vmatmul.mubr.bf16.gmra.mxu0 %v1126
    %v1165 = vpop.f32.mrf.mxu0
    %v1166 = vadd.f32 %v1101, %v1165
    %v1167 = vpop.f32.mrf.mxu0
    %v1168 = vpop.f32.mrf.mxu0
    %v1169 = vadd.f32 %v1105, %v1168
    %v1170 = vpop.f32.mrf.mxu0
    %1171 = vmatprep.mubr.bf16.mxu0 0
    %1172 = vmatmul.mubr.bf16.gmra.mxu0 %v1129
    %v1173 = vpop.f32.mrf.mxu0
    %v1174 = vadd.f32 %v1109, %v1173
    %v1175 = vpop.f32.mrf.mxu0
    %v1176 = vpop.f32.mrf.mxu0
    %v1177 = vadd.f32 %v1113, %v1176
    %v1178 = vpop.f32.mrf.mxu0
    %1179 = vdwg.mxu0
    %v1180 = vmax.f32 %v1166, 0.0
    %v1181 = vmax.f32 %v1169, 0.0
    %v1182 = vmax.f32 %v1174, 0.0
    %v1183 = vmax.f32 %v1177, 0.0
    %s1184 = scalar_lea.vmem [#allocation7], 112
    %v1185 = vld [vmem:[%s1184] sm:$0xf]
    %v1186 = vld [vmem:[%s1184 + $0x4] sm:$0xf]
    %v1187 = vld [vmem:[%s1184 + $0x8] sm:$0xf]
    %v1188 = vld [vmem:[%s1184 + $0xc] sm:$0xf]
    %v1189 = vpack.c.bf16 %v1181, %v1180
    %v1190 = vpack.c.bf16 %v1183, %v1182
    %1191 = vset.pattern.permute.xlu0 9
    %1192 = vperm.xlu0 %1191, %v85
    %v1193 = vpop.permute.xlu0 %1192
    %1195 = vset.pattern.permute.xlu0 9
    %1196 = vperm.xlu0 %1195, %v86
    %v1197 = vpop.permute.xlu0 %1196
    %1199 = vset.pattern.permute.xlu0 9
    %1200 = vperm.xlu0 %1199, %v87
    %v1201 = vpop.permute.xlu0 %1200
    %1203 = vset.pattern.permute.xlu0 9
    %1204 = vperm.xlu0 %1203, %v88
    %v1205 = vpop.permute.xlu0 %1204
    %v1211 = vunpack.c.l.b16 %v1185
    %v1212 = vunpack.c.l.b16 %v1186
    %v1213 = vunpack.c.l.b16 %v1187
    %v1214 = vunpack.c.l.b16 %v1188
    %v1215 = vpack.c.b16 %v1212, %v1211
    %v1216 = vpack.c.b16 %v1214, %v1213
    %v1218 = vsel %vm461, %v1215, 0
    %v1221 = vsel %vm461, %v1216, 0
    %1223 = vmatprep.subr.bf16.mxu0 0
    %1224 = vmatpush1.bf16.msra.mxu0 0
    %1225 = vmatprep.subr.bf16.mxu0 0
    %1226 = vmatpush1.bf16.msra.mxu0 0
    %1227 = vmatprep.subr.bf16.mxu0 0
    %1228 = vmatpush1.bf16.msra.mxu0 0
    %1229 = vmatprep.subr.bf16.mxu0 0
    %1230 = vmatpush1.bf16.msra.mxu0 0
    %1231 = vmatprep.subr.bf16.mxu0 0
    %1232 = vmatpush1.bf16.msra.mxu0 0
    %1233 = vmatprep.subr.bf16.mxu0 0
    %1234 = vmatpush1.bf16.msra.mxu0 0
    %1235 = vmatprep.subr.bf16.mxu0 0
    %1236 = vmatpush1.bf16.msra.mxu0 %v1190
    %1237 = vmatprep.subr.bf16.mxu0 0
    %1238 = vmatpush1.bf16.msra.mxu0 %v1189
    %1239 = vmatprep.subr.bf16.mxu0 0
    %1240 = vmatpush2.bf16.msra.mxu0 0
    %1241 = vmatprep.subr.bf16.mxu0 0
    %1242 = vmatpush2.bf16.msra.mxu0 0
    %1243 = vmatprep.subr.bf16.mxu0 0
    %1244 = vmatpush2.bf16.msra.mxu0 0
    %1245 = vmatprep.subr.bf16.mxu0 0
    %1246 = vmatpush2.bf16.msra.mxu0 0
    %1247 = vmatprep.subr.bf16.mxu0 0
    %1248 = vmatpush2.bf16.msra.mxu0 0
    %1249 = vmatprep.subr.bf16.mxu0 0
    %1250 = vmatpush2.bf16.msra.mxu0 0
    %1251 = vmatprep.subr.bf16.mxu0 0
    %1252 = vmatpush2.bf16.msra.mxu0 0
    %1253 = vmatprep.subr.bf16.mxu0 0
    %1254 = vmatpush2.bf16.msra.mxu0 0
    %1255 = vmatprep.mubr.bf16.mxu0 0
    %1256 = vmatmul.mubr.bf16.gmra.mxu0 %v1218
    %v1257 = vpop.f32.mrf.mxu0
    %v1258 = vadd.f32 %v1193, %v1257
    %v1259 = vpop.f32.mrf.mxu0
    %v1260 = vpop.f32.mrf.mxu0
    %v1261 = vadd.f32 %v1197, %v1260
    %v1262 = vpop.f32.mrf.mxu0
    %1263 = vmatprep.mubr.bf16.mxu0 0
    %1264 = vmatmul.mubr.bf16.gmra.mxu0 %v1221
    %v1265 = vpop.f32.mrf.mxu0
    %v1266 = vadd.f32 %v1201, %v1265
    %v1267 = vpop.f32.mrf.mxu0
    %v1268 = vpop.f32.mrf.mxu0
    %v1269 = vadd.f32 %v1205, %v1268
    %v1270 = vpop.f32.mrf.mxu0
    %1271 = vdwg.mxu0
    %v1272 = vmax.f32 %v1258, 0.0
    %v1273 = vmax.f32 %v1261, 0.0
    %v1274 = vmax.f32 %v1266, 0.0
    %v1275 = vmax.f32 %v1269, 0.0
    %v1276 = vadd.f32 %v1088, %v1272
    %v1277 = vadd.f32 %v1089, %v1273
    %v1278 = vadd.f32 %v1090, %v1274
    %v1279 = vadd.f32 %v1091, %v1275
    %v1280 = vpack.c.bf16 %v1277, %v1276
    %v1281 = vpack.c.bf16 %v1279, %v1278
    %vm1282 = vcmask 523264
    %v1284 = vsel %vm1282, %v1280, 0
    %v1287 = vsel %vm1282, %v1281, 0
    %1289 = vmatprep.subr.bf16.mxu0 0
    %1290 = vmatpush1.bf16.msra.mxu0 0
    %1291 = vmatprep.subr.bf16.mxu0 0
    %1292 = vmatpush1.bf16.msra.mxu0 0
    %1293 = vmatprep.subr.bf16.mxu0 0
    %1294 = vmatpush1.bf16.msra.mxu0 0
    %1295 = vmatprep.subr.bf16.mxu0 0
    %1296 = vmatpush1.bf16.msra.mxu0 0
    %1297 = vmatprep.subr.bf16.mxu0 0
    %1298 = vmatpush1.bf16.msra.mxu0 %v842
    %1299 = vmatprep.subr.bf16.mxu0 0
    %1300 = vmatpush1.bf16.msra.mxu0 %v841
    %1301 = vmatprep.subr.bf16.mxu0 0
    %1302 = vmatpush1.bf16.msra.mxu0 %v840
    %1303 = vmatprep.subr.bf16.mxu0 0
    %1304 = vmatpush1.bf16.msra.mxu0 %v839
    %1305 = vmatprep.subr.bf16.mxu0 0
    %1306 = vmatpush2.bf16.msra.mxu0 0
    %1307 = vmatprep.subr.bf16.mxu0 0
    %1308 = vmatpush2.bf16.msra.mxu0 0
    %1309 = vmatprep.subr.bf16.mxu0 0
    %1310 = vmatpush2.bf16.msra.mxu0 0
    %1311 = vmatprep.subr.bf16.mxu0 0
    %1312 = vmatpush2.bf16.msra.mxu0 0
    %1313 = vmatprep.subr.bf16.mxu0 0
    %1314 = vmatpush2.bf16.msra.mxu0 0
    %1315 = vmatprep.subr.bf16.mxu0 0
    %1316 = vmatpush2.bf16.msra.mxu0 0
    %1317 = vmatprep.subr.bf16.mxu0 0
    %1318 = vmatpush2.bf16.msra.mxu0 0
    %1319 = vmatprep.subr.bf16.mxu0 0
    %1320 = vmatpush2.bf16.msra.mxu0 0
    %1321 = vmatprep.mubr.bf16.mxu0 0
    %1322 = vmatmul.mubr.bf16.gmra.mxu0 %v1284
    %v1323 = vpop.f32.mrf.mxu0
    %v1324 = vadd.f32 0.0, %v1323
    %v1325 = vpop.f32.mrf.mxu0
    %v1326 = vpop.f32.mrf.mxu0
    %v1327 = vadd.f32 0.0, %v1326
    %v1328 = vpop.f32.mrf.mxu0
    %1329 = vmatprep.mubr.bf16.mxu0 0
    %1330 = vmatmul.mubr.bf16.gmra.mxu0 %v1287
    %v1331 = vpop.f32.mrf.mxu0
    %v1332 = vadd.f32 0.0, %v1331
    %v1333 = vpop.f32.mrf.mxu0
    %v1334 = vpop.f32.mrf.mxu0
    %v1335 = vadd.f32 0.0, %v1334
    %v1336 = vpop.f32.mrf.mxu0
    %1337 = vdwg.mxu0
    %s1338 = scalar_lea.vmem [#allocation7], 128
    %v1339 = vld [vmem:[%s1338] sm:$0xf]
    %v1340 = vld [vmem:[%s1338 + $0x4] sm:$0xf]
    %v1341 = vld [vmem:[%s1338 + $0x8] sm:$0xf]
    %v1342 = vld [vmem:[%s1338 + $0xc] sm:$0xf]
    %v1343 = vpack.c.bf16 %v1327, %v1324
    %v1344 = vpack.c.bf16 %v1335, %v1332
    %1345 = vset.pattern.permute.xlu0 10
    %1346 = vperm.xlu0 %1345, %v85
    %v1347 = vpop.permute.xlu0 %1346
    %1349 = vset.pattern.permute.xlu0 10
    %1350 = vperm.xlu0 %1349, %v86
    %v1351 = vpop.permute.xlu0 %1350
    %1353 = vset.pattern.permute.xlu0 10
    %1354 = vperm.xlu0 %1353, %v87
    %v1355 = vpop.permute.xlu0 %1354
    %1357 = vset.pattern.permute.xlu0 10
    %1358 = vperm.xlu0 %1357, %v88
    %v1359 = vpop.permute.xlu0 %1358
    %v1365 = vunpack.c.l.b16 %v1339
    %v1366 = vunpack.c.l.b16 %v1340
    %v1367 = vunpack.c.l.b16 %v1341
    %v1368 = vunpack.c.l.b16 %v1342
    %v1369 = vpack.c.b16 %v1366, %v1365
    %v1370 = vpack.c.b16 %v1368, %v1367
    %v1372 = vsel %vm461, %v1369, 0
    %v1375 = vsel %vm461, %v1370, 0
    %1377 = vmatprep.subr.bf16.mxu0 0
    %1378 = vmatpush1.bf16.msra.mxu0 0
    %1379 = vmatprep.subr.bf16.mxu0 0
    %1380 = vmatpush1.bf16.msra.mxu0 0
    %1381 = vmatprep.subr.bf16.mxu0 0
    %1382 = vmatpush1.bf16.msra.mxu0 0
    %1383 = vmatprep.subr.bf16.mxu0 0
    %1384 = vmatpush1.bf16.msra.mxu0 0
    %1385 = vmatprep.subr.bf16.mxu0 0
    %1386 = vmatpush1.bf16.msra.mxu0 0
    %1387 = vmatprep.subr.bf16.mxu0 0
    %1388 = vmatpush1.bf16.msra.mxu0 0
    %1389 = vmatprep.subr.bf16.mxu0 0
    %1390 = vmatpush1.bf16.msra.mxu0 %v1344
    %1391 = vmatprep.subr.bf16.mxu0 0
    %1392 = vmatpush1.bf16.msra.mxu0 %v1343
    %1393 = vmatprep.subr.bf16.mxu0 0
    %1394 = vmatpush2.bf16.msra.mxu0 0
    %1395 = vmatprep.subr.bf16.mxu0 0
    %1396 = vmatpush2.bf16.msra.mxu0 0
    %1397 = vmatprep.subr.bf16.mxu0 0
    %1398 = vmatpush2.bf16.msra.mxu0 0
    %1399 = vmatprep.subr.bf16.mxu0 0
    %1400 = vmatpush2.bf16.msra.mxu0 0
    %1401 = vmatprep.subr.bf16.mxu0 0
    %1402 = vmatpush2.bf16.msra.mxu0 0
    %1403 = vmatprep.subr.bf16.mxu0 0
    %1404 = vmatpush2.bf16.msra.mxu0 0
    %1405 = vmatprep.subr.bf16.mxu0 0
    %1406 = vmatpush2.bf16.msra.mxu0 0
    %1407 = vmatprep.subr.bf16.mxu0 0
    %1408 = vmatpush2.bf16.msra.mxu0 0
    %1409 = vmatprep.mubr.bf16.mxu0 0
    %1410 = vmatmul.mubr.bf16.gmra.mxu0 %v1372
    %v1411 = vpop.f32.mrf.mxu0
    %v1412 = vadd.f32 %v1347, %v1411
    %v1413 = vpop.f32.mrf.mxu0
    %v1414 = vpop.f32.mrf.mxu0
    %v1415 = vadd.f32 %v1351, %v1414
    %v1416 = vpop.f32.mrf.mxu0
    %1417 = vmatprep.mubr.bf16.mxu0 0
    %1418 = vmatmul.mubr.bf16.gmra.mxu0 %v1375
    %v1419 = vpop.f32.mrf.mxu0
    %v1420 = vadd.f32 %v1355, %v1419
    %v1421 = vpop.f32.mrf.mxu0
    %v1422 = vpop.f32.mrf.mxu0
    %v1423 = vadd.f32 %v1359, %v1422
    %v1424 = vpop.f32.mrf.mxu0
    %1425 = vdwg.mxu0
    %v1426 = vmax.f32 %v1412, 0.0
    %v1427 = vmax.f32 %v1415, 0.0
    %v1428 = vmax.f32 %v1420, 0.0
    %v1429 = vmax.f32 %v1423, 0.0
    %s1430 = scalar_lea.vmem [#allocation7], 144
    %v1431 = vld [vmem:[%s1430] sm:$0xf]
    %v1432 = vld [vmem:[%s1430 + $0x4] sm:$0xf]
    %v1433 = vld [vmem:[%s1430 + $0x8] sm:$0xf]
    %v1434 = vld [vmem:[%s1430 + $0xc] sm:$0xf]
    %v1435 = vpack.c.bf16 %v1427, %v1426
    %v1436 = vpack.c.bf16 %v1429, %v1428
    %1437 = vset.pattern.permute.xlu0 11
    %1438 = vperm.xlu0 %1437, %v85
    %v1439 = vpop.permute.xlu0 %1438
    %1441 = vset.pattern.permute.xlu0 11
    %1442 = vperm.xlu0 %1441, %v86
    %v1443 = vpop.permute.xlu0 %1442
    %1445 = vset.pattern.permute.xlu0 11
    %1446 = vperm.xlu0 %1445, %v87
    %v1447 = vpop.permute.xlu0 %1446
    %1449 = vset.pattern.permute.xlu0 11
    %1450 = vperm.xlu0 %1449, %v88
    %v1451 = vpop.permute.xlu0 %1450
    %v1457 = vunpack.c.l.b16 %v1431
    %v1458 = vunpack.c.l.b16 %v1432
    %v1459 = vunpack.c.l.b16 %v1433
    %v1460 = vunpack.c.l.b16 %v1434
    %v1461 = vpack.c.b16 %v1458, %v1457
    %v1462 = vpack.c.b16 %v1460, %v1459
    %v1464 = vsel %vm461, %v1461, 0
    %v1467 = vsel %vm461, %v1462, 0
    %1469 = vmatprep.subr.bf16.mxu0 0
    %1470 = vmatpush1.bf16.msra.mxu0 0
    %1471 = vmatprep.subr.bf16.mxu0 0
    %1472 = vmatpush1.bf16.msra.mxu0 0
    %1473 = vmatprep.subr.bf16.mxu0 0
    %1474 = vmatpush1.bf16.msra.mxu0 0
    %1475 = vmatprep.subr.bf16.mxu0 0
    %1476 = vmatpush1.bf16.msra.mxu0 0
    %1477 = vmatprep.subr.bf16.mxu0 0
    %1478 = vmatpush1.bf16.msra.mxu0 0
    %1479 = vmatprep.subr.bf16.mxu0 0
    %1480 = vmatpush1.bf16.msra.mxu0 0
    %1481 = vmatprep.subr.bf16.mxu0 0
    %1482 = vmatpush1.bf16.msra.mxu0 %v1436
    %1483 = vmatprep.subr.bf16.mxu0 0
    %1484 = vmatpush1.bf16.msra.mxu0 %v1435
    %1485 = vmatprep.subr.bf16.mxu0 0
    %1486 = vmatpush2.bf16.msra.mxu0 0
    %1487 = vmatprep.subr.bf16.mxu0 0
    %1488 = vmatpush2.bf16.msra.mxu0 0
    %1489 = vmatprep.subr.bf16.mxu0 0
    %1490 = vmatpush2.bf16.msra.mxu0 0
    %1491 = vmatprep.subr.bf16.mxu0 0
    %1492 = vmatpush2.bf16.msra.mxu0 0
    %1493 = vmatprep.subr.bf16.mxu0 0
    %1494 = vmatpush2.bf16.msra.mxu0 0
    %1495 = vmatprep.subr.bf16.mxu0 0
    %1496 = vmatpush2.bf16.msra.mxu0 0
    %1497 = vmatprep.subr.bf16.mxu0 0
    %1498 = vmatpush2.bf16.msra.mxu0 0
    %1499 = vmatprep.subr.bf16.mxu0 0
    %1500 = vmatpush2.bf16.msra.mxu0 0
    %1501 = vmatprep.mubr.bf16.mxu0 0
    %1502 = vmatmul.mubr.bf16.gmra.mxu0 %v1464
    %v1503 = vpop.f32.mrf.mxu0
    %v1504 = vadd.f32 %v1439, %v1503
    %v1505 = vpop.f32.mrf.mxu0
    %v1506 = vpop.f32.mrf.mxu0
    %v1507 = vadd.f32 %v1443, %v1506
    %v1508 = vpop.f32.mrf.mxu0
    %1509 = vmatprep.mubr.bf16.mxu0 0
    %1510 = vmatmul.mubr.bf16.gmra.mxu0 %v1467
    %v1511 = vpop.f32.mrf.mxu0
    %v1512 = vadd.f32 %v1447, %v1511
    %v1513 = vpop.f32.mrf.mxu0
    %v1514 = vpop.f32.mrf.mxu0
    %v1515 = vadd.f32 %v1451, %v1514
    %v1516 = vpop.f32.mrf.mxu0
    %1517 = vdwg.mxu0
    %v1518 = vmax.f32 %v1504, 0.0
    %v1519 = vmax.f32 %v1507, 0.0
    %v1520 = vmax.f32 %v1512, 0.0
    %v1521 = vmax.f32 %v1515, 0.0
    %v1522 = vadd.f32 %v1324, %v1518
    %v1523 = vadd.f32 %v1327, %v1519
    %v1524 = vadd.f32 %v1332, %v1520
    %v1525 = vadd.f32 %v1335, %v1521
    %s1526 = scalar_lea.vmem [#allocation7], 160
    %v1527 = vld [vmem:[%s1526] sm:$0xf]
    %v1528 = vld [vmem:[%s1526 + $0x4] sm:$0xf]
    %v1529 = vld [vmem:[%s1526 + $0x8] sm:$0xf]
    %v1530 = vld [vmem:[%s1526 + $0xc] sm:$0xf]
    %v1531 = vpack.c.bf16 %v1523, %v1522
    %v1532 = vpack.c.bf16 %v1525, %v1524
    %1533 = vset.pattern.permute.xlu0 12
    %1534 = vperm.xlu0 %1533, %v85
    %v1535 = vpop.permute.xlu0 %1534
    %1537 = vset.pattern.permute.xlu0 12
    %1538 = vperm.xlu0 %1537, %v86
    %v1539 = vpop.permute.xlu0 %1538
    %1541 = vset.pattern.permute.xlu0 12
    %1542 = vperm.xlu0 %1541, %v87
    %v1543 = vpop.permute.xlu0 %1542
    %1545 = vset.pattern.permute.xlu0 12
    %1546 = vperm.xlu0 %1545, %v88
    %v1547 = vpop.permute.xlu0 %1546
    %v1553 = vunpack.c.l.b16 %v1527
    %v1554 = vunpack.c.l.b16 %v1528
    %v1555 = vunpack.c.l.b16 %v1529
    %v1556 = vunpack.c.l.b16 %v1530
    %v1557 = vpack.c.b16 %v1554, %v1553
    %v1558 = vpack.c.b16 %v1556, %v1555
    %v1560 = vsel %vm461, %v1557, 0
    %v1563 = vsel %vm461, %v1558, 0
    %1565 = vmatprep.subr.bf16.mxu0 0
    %1566 = vmatpush1.bf16.msra.mxu0 0
    %1567 = vmatprep.subr.bf16.mxu0 0
    %1568 = vmatpush1.bf16.msra.mxu0 0
    %1569 = vmatprep.subr.bf16.mxu0 0
    %1570 = vmatpush1.bf16.msra.mxu0 0
    %1571 = vmatprep.subr.bf16.mxu0 0
    %1572 = vmatpush1.bf16.msra.mxu0 0
    %1573 = vmatprep.subr.bf16.mxu0 0
    %1574 = vmatpush1.bf16.msra.mxu0 0
    %1575 = vmatprep.subr.bf16.mxu0 0
    %1576 = vmatpush1.bf16.msra.mxu0 0
    %1577 = vmatprep.subr.bf16.mxu0 0
    %1578 = vmatpush1.bf16.msra.mxu0 %v1532
    %1579 = vmatprep.subr.bf16.mxu0 0
    %1580 = vmatpush1.bf16.msra.mxu0 %v1531
    %1581 = vmatprep.subr.bf16.mxu0 0
    %1582 = vmatpush2.bf16.msra.mxu0 0
    %1583 = vmatprep.subr.bf16.mxu0 0
    %1584 = vmatpush2.bf16.msra.mxu0 0
    %1585 = vmatprep.subr.bf16.mxu0 0
    %1586 = vmatpush2.bf16.msra.mxu0 0
    %1587 = vmatprep.subr.bf16.mxu0 0
    %1588 = vmatpush2.bf16.msra.mxu0 0
    %1589 = vmatprep.subr.bf16.mxu0 0
    %1590 = vmatpush2.bf16.msra.mxu0 0
    %1591 = vmatprep.subr.bf16.mxu0 0
    %1592 = vmatpush2.bf16.msra.mxu0 0
    %1593 = vmatprep.subr.bf16.mxu0 0
    %1594 = vmatpush2.bf16.msra.mxu0 0
    %1595 = vmatprep.subr.bf16.mxu0 0
    %1596 = vmatpush2.bf16.msra.mxu0 0
    %1597 = vmatprep.mubr.bf16.mxu0 0
    %1598 = vmatmul.mubr.bf16.gmra.mxu0 %v1560
    %v1599 = vpop.f32.mrf.mxu0
    %v1600 = vadd.f32 %v1535, %v1599
    %v1601 = vpop.f32.mrf.mxu0
    %v1602 = vpop.f32.mrf.mxu0
    %v1603 = vadd.f32 %v1539, %v1602
    %v1604 = vpop.f32.mrf.mxu0
    %1605 = vmatprep.mubr.bf16.mxu0 0
    %1606 = vmatmul.mubr.bf16.gmra.mxu0 %v1563
    %v1607 = vpop.f32.mrf.mxu0
    %v1608 = vadd.f32 %v1543, %v1607
    %v1609 = vpop.f32.mrf.mxu0
    %v1610 = vpop.f32.mrf.mxu0
    %v1611 = vadd.f32 %v1547, %v1610
    %v1612 = vpop.f32.mrf.mxu0
    %1613 = vdwg.mxu0
    %v1614 = vmax.f32 %v1600, 0.0
    %v1615 = vmax.f32 %v1603, 0.0
    %v1616 = vmax.f32 %v1608, 0.0
    %v1617 = vmax.f32 %v1611, 0.0
    %s1618 = scalar_lea.vmem [#allocation7], 176
    %v1619 = vld [vmem:[%s1618] sm:$0xf]
    %v1620 = vld [vmem:[%s1618 + $0x4] sm:$0xf]
    %v1621 = vld [vmem:[%s1618 + $0x8] sm:$0xf]
    %v1622 = vld [vmem:[%s1618 + $0xc] sm:$0xf]
    %v1623 = vpack.c.bf16 %v1615, %v1614
    %v1624 = vpack.c.bf16 %v1617, %v1616
    %1625 = vset.pattern.permute.xlu0 13
    %1626 = vperm.xlu0 %1625, %v85
    %v1627 = vpop.permute.xlu0 %1626
    %1629 = vset.pattern.permute.xlu0 13
    %1630 = vperm.xlu0 %1629, %v86
    %v1631 = vpop.permute.xlu0 %1630
    %1633 = vset.pattern.permute.xlu0 13
    %1634 = vperm.xlu0 %1633, %v87
    %v1635 = vpop.permute.xlu0 %1634
    %1637 = vset.pattern.permute.xlu0 13
    %1638 = vperm.xlu0 %1637, %v88
    %v1639 = vpop.permute.xlu0 %1638
    %v1645 = vunpack.c.l.b16 %v1619
    %v1646 = vunpack.c.l.b16 %v1620
    %v1647 = vunpack.c.l.b16 %v1621
    %v1648 = vunpack.c.l.b16 %v1622
    %v1649 = vpack.c.b16 %v1646, %v1645
    %v1650 = vpack.c.b16 %v1648, %v1647
    %v1652 = vsel %vm461, %v1649, 0
    %v1655 = vsel %vm461, %v1650, 0
    %1657 = vmatprep.subr.bf16.mxu0 0
    %1658 = vmatpush1.bf16.msra.mxu0 0
    %1659 = vmatprep.subr.bf16.mxu0 0
    %1660 = vmatpush1.bf16.msra.mxu0 0
    %1661 = vmatprep.subr.bf16.mxu0 0
    %1662 = vmatpush1.bf16.msra.mxu0 0
    %1663 = vmatprep.subr.bf16.mxu0 0
    %1664 = vmatpush1.bf16.msra.mxu0 0
    %1665 = vmatprep.subr.bf16.mxu0 0
    %1666 = vmatpush1.bf16.msra.mxu0 0
    %1667 = vmatprep.subr.bf16.mxu0 0
    %1668 = vmatpush1.bf16.msra.mxu0 0
    %1669 = vmatprep.subr.bf16.mxu0 0
    %1670 = vmatpush1.bf16.msra.mxu0 %v1624
    %1671 = vmatprep.subr.bf16.mxu0 0
    %1672 = vmatpush1.bf16.msra.mxu0 %v1623
    %1673 = vmatprep.subr.bf16.mxu0 0
    %1674 = vmatpush2.bf16.msra.mxu0 0
    %1675 = vmatprep.subr.bf16.mxu0 0
    %1676 = vmatpush2.bf16.msra.mxu0 0
    %1677 = vmatprep.subr.bf16.mxu0 0
    %1678 = vmatpush2.bf16.msra.mxu0 0
    %1679 = vmatprep.subr.bf16.mxu0 0
    %1680 = vmatpush2.bf16.msra.mxu0 0
    %1681 = vmatprep.subr.bf16.mxu0 0
    %1682 = vmatpush2.bf16.msra.mxu0 0
    %1683 = vmatprep.subr.bf16.mxu0 0
    %1684 = vmatpush2.bf16.msra.mxu0 0
    %1685 = vmatprep.subr.bf16.mxu0 0
    %1686 = vmatpush2.bf16.msra.mxu0 0
    %1687 = vmatprep.subr.bf16.mxu0 0
    %1688 = vmatpush2.bf16.msra.mxu0 0
    %1689 = vmatprep.mubr.bf16.mxu0 0
    %1690 = vmatmul.mubr.bf16.gmra.mxu0 %v1652
    %v1691 = vpop.f32.mrf.mxu0
    %v1692 = vadd.f32 %v1627, %v1691
    %v1693 = vpop.f32.mrf.mxu0
    %v1694 = vpop.f32.mrf.mxu0
    %v1695 = vadd.f32 %v1631, %v1694
    %v1696 = vpop.f32.mrf.mxu0
    %1697 = vmatprep.mubr.bf16.mxu0 0
    %1698 = vmatmul.mubr.bf16.gmra.mxu0 %v1655
    %v1699 = vpop.f32.mrf.mxu0
    %v1700 = vadd.f32 %v1635, %v1699
    %v1701 = vpop.f32.mrf.mxu0
    %v1702 = vpop.f32.mrf.mxu0
    %v1703 = vadd.f32 %v1639, %v1702
    %v1704 = vpop.f32.mrf.mxu0
    %1705 = vdwg.mxu0
    %v1706 = vmax.f32 %v1692, 0.0
    %v1707 = vmax.f32 %v1695, 0.0
    %v1708 = vmax.f32 %v1700, 0.0
    %v1709 = vmax.f32 %v1703, 0.0
    %v1710 = vadd.f32 %v1522, %v1706
    %v1711 = vadd.f32 %v1523, %v1707
    %v1712 = vadd.f32 %v1524, %v1708
    %v1713 = vadd.f32 %v1525, %v1709
    %v1714 = vpack.c.bf16 %v1711, %v1710
    %v1715 = vpack.c.bf16 %v1713, %v1712
    %v1717 = vsel %vm461, %v1714, 0
    %v1720 = vsel %vm461, %v1715, 0
    %1722 = vmatprep.subr.bf16.mxu0 0
    %1723 = vmatpush1.bf16.msra.mxu0 0
    %1724 = vmatprep.subr.bf16.mxu0 0
    %1725 = vmatpush1.bf16.msra.mxu0 0
    %1726 = vmatprep.subr.bf16.mxu0 0
    %1727 = vmatpush1.bf16.msra.mxu0 0
    %1728 = vmatprep.subr.bf16.mxu0 0
    %1729 = vmatpush1.bf16.msra.mxu0 0
    %1730 = vmatprep.subr.bf16.mxu0 0
    %1731 = vmatpush1.bf16.msra.mxu0 0
    %1732 = vmatprep.subr.bf16.mxu0 0
    %1733 = vmatpush1.bf16.msra.mxu0 0
    %1734 = vmatprep.subr.bf16.mxu0 0
    %1735 = vmatpush1.bf16.msra.mxu0 %v840
    %1736 = vmatprep.subr.bf16.mxu0 0
    %1737 = vmatpush1.bf16.msra.mxu0 %v839
    %1738 = vmatprep.subr.bf16.mxu0 0
    %1739 = vmatpush2.bf16.msra.mxu0 0
    %1740 = vmatprep.subr.bf16.mxu0 0
    %1741 = vmatpush2.bf16.msra.mxu0 0
    %1742 = vmatprep.subr.bf16.mxu0 0
    %1743 = vmatpush2.bf16.msra.mxu0 0
    %1744 = vmatprep.subr.bf16.mxu0 0
    %1745 = vmatpush2.bf16.msra.mxu0 0
    %1746 = vmatprep.subr.bf16.mxu0 0
    %1747 = vmatpush2.bf16.msra.mxu0 0
    %1748 = vmatprep.subr.bf16.mxu0 0
    %1749 = vmatpush2.bf16.msra.mxu0 0
    %1750 = vmatprep.subr.bf16.mxu0 0
    %1751 = vmatpush2.bf16.msra.mxu0 0
    %1752 = vmatprep.subr.bf16.mxu0 0
    %1753 = vmatpush2.bf16.msra.mxu0 0
    %1754 = vmatprep.mubr.bf16.mxu0 0
    %1755 = vmatmul.mubr.bf16.gmra.mxu0 %v1717
    %v1756 = vpop.f32.mrf.mxu0
    %v1757 = vadd.f32 0.0, %v1756
    %v1758 = vpop.f32.mrf.mxu0
    %v1759 = vpop.f32.mrf.mxu0
    %v1760 = vadd.f32 0.0, %v1759
    %v1761 = vpop.f32.mrf.mxu0
    %1762 = vmatprep.mubr.bf16.mxu0 0
    %1763 = vmatmul.mubr.bf16.gmra.mxu0 %v1720
    %v1764 = vpop.f32.mrf.mxu0
    %v1765 = vadd.f32 0.0, %v1764
    %v1766 = vpop.f32.mrf.mxu0
    %v1767 = vpop.f32.mrf.mxu0
    %v1768 = vadd.f32 0.0, %v1767
    %v1769 = vpop.f32.mrf.mxu0
    %1770 = vdwg.mxu0
    %s1771 = scalar_lea.vmem [#allocation7], 192
    %v1772 = vld [vmem:[%s1771] sm:$0xf]
    %v1773 = vld [vmem:[%s1771 + $0x4] sm:$0xf]
    %v1774 = vld [vmem:[%s1771 + $0x8] sm:$0xf]
    %v1775 = vld [vmem:[%s1771 + $0xc] sm:$0xf]
    %v1776 = vpack.c.bf16 %v1760, %v1757
    %v1777 = vpack.c.bf16 %v1768, %v1765
    %1778 = vset.pattern.permute.xlu0 14
    %1779 = vperm.xlu0 %1778, %v85
    %v1780 = vpop.permute.xlu0 %1779
    %1782 = vset.pattern.permute.xlu0 14
    %1783 = vperm.xlu0 %1782, %v86
    %v1784 = vpop.permute.xlu0 %1783
    %1786 = vset.pattern.permute.xlu0 14
    %1787 = vperm.xlu0 %1786, %v87
    %v1788 = vpop.permute.xlu0 %1787
    %1790 = vset.pattern.permute.xlu0 14
    %1791 = vperm.xlu0 %1790, %v88
    %v1792 = vpop.permute.xlu0 %1791
    %v1798 = vunpack.c.l.b16 %v1772
    %v1799 = vunpack.c.l.b16 %v1773
    %v1800 = vunpack.c.l.b16 %v1774
    %v1801 = vunpack.c.l.b16 %v1775
    %v1802 = vpack.c.b16 %v1799, %v1798
    %v1803 = vpack.c.b16 %v1801, %v1800
    %v1805 = vsel %vm461, %v1802, 0
    %v1808 = vsel %vm461, %v1803, 0
    %1810 = vmatprep.subr.bf16.mxu0 0
    %1811 = vmatpush1.bf16.msra.mxu0 0
    %1812 = vmatprep.subr.bf16.mxu0 0
    %1813 = vmatpush1.bf16.msra.mxu0 0
    %1814 = vmatprep.subr.bf16.mxu0 0
    %1815 = vmatpush1.bf16.msra.mxu0 0
    %1816 = vmatprep.subr.bf16.mxu0 0
    %1817 = vmatpush1.bf16.msra.mxu0 0
    %1818 = vmatprep.subr.bf16.mxu0 0
    %1819 = vmatpush1.bf16.msra.mxu0 0
    %1820 = vmatprep.subr.bf16.mxu0 0
    %1821 = vmatpush1.bf16.msra.mxu0 0
    %1822 = vmatprep.subr.bf16.mxu0 0
    %1823 = vmatpush1.bf16.msra.mxu0 %v1777
    %1824 = vmatprep.subr.bf16.mxu0 0
    %1825 = vmatpush1.bf16.msra.mxu0 %v1776
    %1826 = vmatprep.subr.bf16.mxu0 0
    %1827 = vmatpush2.bf16.msra.mxu0 0
    %1828 = vmatprep.subr.bf16.mxu0 0
    %1829 = vmatpush2.bf16.msra.mxu0 0
    %1830 = vmatprep.subr.bf16.mxu0 0
    %1831 = vmatpush2.bf16.msra.mxu0 0
    %1832 = vmatprep.subr.bf16.mxu0 0
    %1833 = vmatpush2.bf16.msra.mxu0 0
    %1834 = vmatprep.subr.bf16.mxu0 0
    %1835 = vmatpush2.bf16.msra.mxu0 0
    %1836 = vmatprep.subr.bf16.mxu0 0
    %1837 = vmatpush2.bf16.msra.mxu0 0
    %1838 = vmatprep.subr.bf16.mxu0 0
    %1839 = vmatpush2.bf16.msra.mxu0 0
    %1840 = vmatprep.subr.bf16.mxu0 0
    %1841 = vmatpush2.bf16.msra.mxu0 0
    %1842 = vmatprep.mubr.bf16.mxu0 0
    %1843 = vmatmul.mubr.bf16.gmra.mxu0 %v1805
    %v1844 = vpop.f32.mrf.mxu0
    %v1845 = vadd.f32 %v1780, %v1844
    %v1846 = vpop.f32.mrf.mxu0
    %v1847 = vpop.f32.mrf.mxu0
    %v1848 = vadd.f32 %v1784, %v1847
    %v1849 = vpop.f32.mrf.mxu0
    %1850 = vmatprep.mubr.bf16.mxu0 0
    %1851 = vmatmul.mubr.bf16.gmra.mxu0 %v1808
    %v1852 = vpop.f32.mrf.mxu0
    %v1853 = vadd.f32 %v1788, %v1852
    %v1854 = vpop.f32.mrf.mxu0
    %v1855 = vpop.f32.mrf.mxu0
    %v1856 = vadd.f32 %v1792, %v1855
    %v1857 = vpop.f32.mrf.mxu0
    %1858 = vdwg.mxu0
    %v1859 = vmax.f32 %v1845, 0.0
    %v1860 = vmax.f32 %v1848, 0.0
    %v1861 = vmax.f32 %v1853, 0.0
    %v1862 = vmax.f32 %v1856, 0.0
    %s1863 = scalar_lea.vmem [#allocation7], 208
    %v1864 = vld [vmem:[%s1863] sm:$0xf]
    %v1865 = vld [vmem:[%s1863 + $0x4] sm:$0xf]
    %v1866 = vld [vmem:[%s1863 + $0x8] sm:$0xf]
    %v1867 = vld [vmem:[%s1863 + $0xc] sm:$0xf]
    %v1868 = vpack.c.bf16 %v1860, %v1859
    %v1869 = vpack.c.bf16 %v1862, %v1861
    %1870 = vset.pattern.permute.xlu0 15
    %1871 = vperm.xlu0 %1870, %v85
    %v1872 = vpop.permute.xlu0 %1871
    %1874 = vset.pattern.permute.xlu0 15
    %1875 = vperm.xlu0 %1874, %v86
    %v1876 = vpop.permute.xlu0 %1875
    %1878 = vset.pattern.permute.xlu0 15
    %1879 = vperm.xlu0 %1878, %v87
    %v1880 = vpop.permute.xlu0 %1879
    %1882 = vset.pattern.permute.xlu0 15
    %1883 = vperm.xlu0 %1882, %v88
    %v1884 = vpop.permute.xlu0 %1883
    %v1890 = vunpack.c.l.b16 %v1864
    %v1891 = vunpack.c.l.b16 %v1865
    %v1892 = vunpack.c.l.b16 %v1866
    %v1893 = vunpack.c.l.b16 %v1867
    %v1894 = vpack.c.b16 %v1891, %v1890
    %v1895 = vpack.c.b16 %v1893, %v1892
    %v1897 = vsel %vm461, %v1894, 0
    %v1900 = vsel %vm461, %v1895, 0
    %1902 = vmatprep.subr.bf16.mxu0 0
    %1903 = vmatpush1.bf16.msra.mxu0 0
    %1904 = vmatprep.subr.bf16.mxu0 0
    %1905 = vmatpush1.bf16.msra.mxu0 0
    %1906 = vmatprep.subr.bf16.mxu0 0
    %1907 = vmatpush1.bf16.msra.mxu0 0
    %1908 = vmatprep.subr.bf16.mxu0 0
    %1909 = vmatpush1.bf16.msra.mxu0 0
    %1910 = vmatprep.subr.bf16.mxu0 0
    %1911 = vmatpush1.bf16.msra.mxu0 0
    %1912 = vmatprep.subr.bf16.mxu0 0
    %1913 = vmatpush1.bf16.msra.mxu0 0
    %1914 = vmatprep.subr.bf16.mxu0 0
    %1915 = vmatpush1.bf16.msra.mxu0 %v1869
    %1916 = vmatprep.subr.bf16.mxu0 0
    %1917 = vmatpush1.bf16.msra.mxu0 %v1868
    %1918 = vmatprep.subr.bf16.mxu0 0
    %1919 = vmatpush2.bf16.msra.mxu0 0
    %1920 = vmatprep.subr.bf16.mxu0 0
    %1921 = vmatpush2.bf16.msra.mxu0 0
    %1922 = vmatprep.subr.bf16.mxu0 0
    %1923 = vmatpush2.bf16.msra.mxu0 0
    %1924 = vmatprep.subr.bf16.mxu0 0
    %1925 = vmatpush2.bf16.msra.mxu0 0
    %1926 = vmatprep.subr.bf16.mxu0 0
    %1927 = vmatpush2.bf16.msra.mxu0 0
    %1928 = vmatprep.subr.bf16.mxu0 0
    %1929 = vmatpush2.bf16.msra.mxu0 0
    %1930 = vmatprep.subr.bf16.mxu0 0
    %1931 = vmatpush2.bf16.msra.mxu0 0
    %1932 = vmatprep.subr.bf16.mxu0 0
    %1933 = vmatpush2.bf16.msra.mxu0 0
    %1934 = vmatprep.mubr.bf16.mxu0 0
    %1935 = vmatmul.mubr.bf16.gmra.mxu0 %v1897
    %v1936 = vpop.f32.mrf.mxu0
    %v1937 = vadd.f32 %v1872, %v1936
    %v1938 = vpop.f32.mrf.mxu0
    %v1939 = vpop.f32.mrf.mxu0
    %v1940 = vadd.f32 %v1876, %v1939
    %v1941 = vpop.f32.mrf.mxu0
    %1942 = vmatprep.mubr.bf16.mxu0 0
    %1943 = vmatmul.mubr.bf16.gmra.mxu0 %v1900
    %v1944 = vpop.f32.mrf.mxu0
    %v1945 = vadd.f32 %v1880, %v1944
    %v1946 = vpop.f32.mrf.mxu0
    %v1947 = vpop.f32.mrf.mxu0
    %v1948 = vadd.f32 %v1884, %v1947
    %v1949 = vpop.f32.mrf.mxu0
    %1950 = vdwg.mxu0
    %v1951 = vmax.f32 %v1937, 0.0
    %v1952 = vmax.f32 %v1940, 0.0
    %v1953 = vmax.f32 %v1945, 0.0
    %v1954 = vmax.f32 %v1948, 0.0
    %v1955 = vadd.f32 %v1757, %v1951
    %v1956 = vadd.f32 %v1760, %v1952
    %v1957 = vadd.f32 %v1765, %v1953
    %v1958 = vadd.f32 %v1768, %v1954
    %s1959 = scalar_lea.vmem [#allocation7], 224
    %v1960 = vld [vmem:[%s1959] sm:$0xf]
    %v1961 = vld [vmem:[%s1959 + $0x4] sm:$0xf]
    %v1962 = vld [vmem:[%s1959 + $0x8] sm:$0xf]
    %v1963 = vld [vmem:[%s1959 + $0xc] sm:$0xf]
    %v1964 = vpack.c.bf16 %v1956, %v1955
    %v1965 = vpack.c.bf16 %v1958, %v1957
    %1966 = vset.pattern.permute.xlu0 16
    %1967 = vperm.xlu0 %1966, %v85
    %v1968 = vpop.permute.xlu0 %1967
    %1970 = vset.pattern.permute.xlu0 16
    %1971 = vperm.xlu0 %1970, %v86
    %v1972 = vpop.permute.xlu0 %1971
    %1974 = vset.pattern.permute.xlu0 16
    %1975 = vperm.xlu0 %1974, %v87
    %v1976 = vpop.permute.xlu0 %1975
    %1978 = vset.pattern.permute.xlu0 16
    %1979 = vperm.xlu0 %1978, %v88
    %v1980 = vpop.permute.xlu0 %1979
    %v1986 = vunpack.c.l.b16 %v1960
    %v1987 = vunpack.c.l.b16 %v1961
    %v1988 = vunpack.c.l.b16 %v1962
    %v1989 = vunpack.c.l.b16 %v1963
    %v1990 = vpack.c.b16 %v1987, %v1986
    %v1991 = vpack.c.b16 %v1989, %v1988
    %v1993 = vsel %vm461, %v1990, 0
    %v1996 = vsel %vm461, %v1991, 0
    %1998 = vmatprep.subr.bf16.mxu0 0
    %1999 = vmatpush1.bf16.msra.mxu0 0
    %2000 = vmatprep.subr.bf16.mxu0 0
    %2001 = vmatpush1.bf16.msra.mxu0 0
    %2002 = vmatprep.subr.bf16.mxu0 0
    %2003 = vmatpush1.bf16.msra.mxu0 0
    %2004 = vmatprep.subr.bf16.mxu0 0
    %2005 = vmatpush1.bf16.msra.mxu0 0
    %2006 = vmatprep.subr.bf16.mxu0 0
    %2007 = vmatpush1.bf16.msra.mxu0 0
    %2008 = vmatprep.subr.bf16.mxu0 0
    %2009 = vmatpush1.bf16.msra.mxu0 0
    %2010 = vmatprep.subr.bf16.mxu0 0
    %2011 = vmatpush1.bf16.msra.mxu0 %v1965
    %2012 = vmatprep.subr.bf16.mxu0 0
    %2013 = vmatpush1.bf16.msra.mxu0 %v1964
    %2014 = vmatprep.subr.bf16.mxu0 0
    %2015 = vmatpush2.bf16.msra.mxu0 0
    %2016 = vmatprep.subr.bf16.mxu0 0
    %2017 = vmatpush2.bf16.msra.mxu0 0
    %2018 = vmatprep.subr.bf16.mxu0 0
    %2019 = vmatpush2.bf16.msra.mxu0 0
    %2020 = vmatprep.subr.bf16.mxu0 0
    %2021 = vmatpush2.bf16.msra.mxu0 0
    %2022 = vmatprep.subr.bf16.mxu0 0
    %2023 = vmatpush2.bf16.msra.mxu0 0
    %2024 = vmatprep.subr.bf16.mxu0 0
    %2025 = vmatpush2.bf16.msra.mxu0 0
    %2026 = vmatprep.subr.bf16.mxu0 0
    %2027 = vmatpush2.bf16.msra.mxu0 0
    %2028 = vmatprep.subr.bf16.mxu0 0
    %2029 = vmatpush2.bf16.msra.mxu0 0
    %2030 = vmatprep.mubr.bf16.mxu0 0
    %2031 = vmatmul.mubr.bf16.gmra.mxu0 %v1993
    %v2032 = vpop.f32.mrf.mxu0
    %v2033 = vadd.f32 %v1968, %v2032
    %v2034 = vpop.f32.mrf.mxu0
    %v2035 = vpop.f32.mrf.mxu0
    %v2036 = vadd.f32 %v1972, %v2035
    %v2037 = vpop.f32.mrf.mxu0
    %2038 = vmatprep.mubr.bf16.mxu0 0
    %2039 = vmatmul.mubr.bf16.gmra.mxu0 %v1996
    %v2040 = vpop.f32.mrf.mxu0
    %v2041 = vadd.f32 %v1976, %v2040
    %v2042 = vpop.f32.mrf.mxu0
    %v2043 = vpop.f32.mrf.mxu0
    %v2044 = vadd.f32 %v1980, %v2043
    %v2045 = vpop.f32.mrf.mxu0
    %2046 = vdwg.mxu0
    %v2047 = vmax.f32 %v2033, 0.0
    %v2048 = vmax.f32 %v2036, 0.0
    %v2049 = vmax.f32 %v2041, 0.0
    %v2050 = vmax.f32 %v2044, 0.0
    %s2051 = scalar_lea.vmem [#allocation7], 240
    %v2052 = vld [vmem:[%s2051] sm:$0xf]
    %v2053 = vld [vmem:[%s2051 + $0x4] sm:$0xf]
    %v2054 = vld [vmem:[%s2051 + $0x8] sm:$0xf]
    %v2055 = vld [vmem:[%s2051 + $0xc] sm:$0xf]
    %v2056 = vpack.c.bf16 %v2048, %v2047
    %v2057 = vpack.c.bf16 %v2050, %v2049
    %2058 = vset.pattern.permute.xlu0 17
    %2059 = vperm.xlu0 %2058, %v85
    %v2060 = vpop.permute.xlu0 %2059
    %2062 = vset.pattern.permute.xlu0 17
    %2063 = vperm.xlu0 %2062, %v86
    %v2064 = vpop.permute.xlu0 %2063
    %2066 = vset.pattern.permute.xlu0 17
    %2067 = vperm.xlu0 %2066, %v87
    %v2068 = vpop.permute.xlu0 %2067
    %2070 = vset.pattern.permute.xlu0 17
    %2071 = vperm.xlu0 %2070, %v88
    %v2072 = vpop.permute.xlu0 %2071
    %v2078 = vunpack.c.l.b16 %v2052
    %v2079 = vunpack.c.l.b16 %v2053
    %v2080 = vunpack.c.l.b16 %v2054
    %v2081 = vunpack.c.l.b16 %v2055
    %v2082 = vpack.c.b16 %v2079, %v2078
    %v2083 = vpack.c.b16 %v2081, %v2080
    %v2085 = vsel %vm461, %v2082, 0
    %v2088 = vsel %vm461, %v2083, 0
    %2090 = vmatprep.subr.bf16.mxu0 0
    %2091 = vmatpush1.bf16.msra.mxu0 0
    %2092 = vmatprep.subr.bf16.mxu0 0
    %2093 = vmatpush1.bf16.msra.mxu0 0
    %2094 = vmatprep.subr.bf16.mxu0 0
    %2095 = vmatpush1.bf16.msra.mxu0 0
    %2096 = vmatprep.subr.bf16.mxu0 0
    %2097 = vmatpush1.bf16.msra.mxu0 0
    %2098 = vmatprep.subr.bf16.mxu0 0
    %2099 = vmatpush1.bf16.msra.mxu0 0
    %2100 = vmatprep.subr.bf16.mxu0 0
    %2101 = vmatpush1.bf16.msra.mxu0 0
    %2102 = vmatprep.subr.bf16.mxu0 0
    %2103 = vmatpush1.bf16.msra.mxu0 %v2057
    %2104 = vmatprep.subr.bf16.mxu0 0
    %2105 = vmatpush1.bf16.msra.mxu0 %v2056
    %2106 = vmatprep.subr.bf16.mxu0 0
    %2107 = vmatpush2.bf16.msra.mxu0 0
    %2108 = vmatprep.subr.bf16.mxu0 0
    %2109 = vmatpush2.bf16.msra.mxu0 0
    %2110 = vmatprep.subr.bf16.mxu0 0
    %2111 = vmatpush2.bf16.msra.mxu0 0
    %2112 = vmatprep.subr.bf16.mxu0 0
    %2113 = vmatpush2.bf16.msra.mxu0 0
    %2114 = vmatprep.subr.bf16.mxu0 0
    %2115 = vmatpush2.bf16.msra.mxu0 0
    %2116 = vmatprep.subr.bf16.mxu0 0
    %2117 = vmatpush2.bf16.msra.mxu0 0
    %2118 = vmatprep.subr.bf16.mxu0 0
    %2119 = vmatpush2.bf16.msra.mxu0 0
    %2120 = vmatprep.subr.bf16.mxu0 0
    %2121 = vmatpush2.bf16.msra.mxu0 0
    %2122 = vmatprep.mubr.bf16.mxu0 0
    %2123 = vmatmul.mubr.bf16.gmra.mxu0 %v2085
    %v2124 = vpop.f32.mrf.mxu0
    %v2125 = vadd.f32 %v2060, %v2124
    %v2126 = vpop.f32.mrf.mxu0
    %v2127 = vpop.f32.mrf.mxu0
    %v2128 = vadd.f32 %v2064, %v2127
    %v2129 = vpop.f32.mrf.mxu0
    %2130 = vmatprep.mubr.bf16.mxu0 0
    %2131 = vmatmul.mubr.bf16.gmra.mxu0 %v2088
    %v2132 = vpop.f32.mrf.mxu0
    %v2133 = vadd.f32 %v2068, %v2132
    %v2134 = vpop.f32.mrf.mxu0
    %v2135 = vpop.f32.mrf.mxu0
    %v2136 = vadd.f32 %v2072, %v2135
    %v2137 = vpop.f32.mrf.mxu0
    %2138 = vdwg.mxu0
    %v2139 = vmax.f32 %v2125, 0.0
    %v2140 = vmax.f32 %v2128, 0.0
    %v2141 = vmax.f32 %v2133, 0.0
    %v2142 = vmax.f32 %v2136, 0.0
    %v2143 = vadd.f32 %v1955, %v2139
    %v2144 = vadd.f32 %v1956, %v2140
    %v2145 = vadd.f32 %v1957, %v2141
    %v2146 = vadd.f32 %v1958, %v2142
    %v2147 = vld [vmem:[%s7] sm:$0xff]
    %v2148 = vld [vmem:[%s7 + $0x8] sm:$0xff]
    %vm2149 = vcmask 130048
    %v2151 = vsel %vm2149, %v2143, 0
    %v2154 = vsel %vm2149, %v2144, 0
    %v2157 = vsel %vm2149, %v2145, 0
    %v2160 = vsel %vm2149, %v2146, 0
    %2162 = vmatprep.subr.mxu0 0.0
    %2163 = vmatpush1.msra.mxu0 0.0
    %2164 = vmatprep.subr.mxu0 0.0
    %2165 = vmatpush1.msra.mxu0 0.0
    %2166 = vmatprep.subr.mxu0 0.0
    %2167 = vmatpush1.msra.mxu0 0.0
    %2168 = vmatprep.subr.mxu0 0.0
    %2169 = vmatpush1.msra.mxu0 0.0
    %2170 = vmatprep.subr.mxu0 0.0
    %2171 = vmatpush1.msra.mxu0 0.0
    %2172 = vmatprep.subr.mxu0 0.0
    %2173 = vmatpush1.msra.mxu0 0.0
    %2174 = vmatprep.subr.mxu0 0.0
    %2175 = vmatpush1.msra.mxu0 0.0
    %2176 = vmatprep.subr.mxu0 0.0
    %2177 = vmatpush1.msra.mxu0 0.0
    %2178 = vmatprep.subr.mxu0 0.0
    %2179 = vmatpush1.msra.mxu0 0.0
    %2180 = vmatprep.subr.mxu0 0.0
    %2181 = vmatpush1.msra.mxu0 0.0
    %2182 = vmatprep.subr.mxu0 0.0
    %2183 = vmatpush1.msra.mxu0 0.0
    %2184 = vmatprep.subr.mxu0 0.0
    %2185 = vmatpush1.msra.mxu0 0.0
    %2186 = vmatprep.subr.mxu0 0.0
    %2187 = vmatpush1.msra.mxu0 0.0
    %2188 = vmatprep.subr.mxu0 0.0
    %2189 = vmatpush1.msra.mxu0 0.0
    %2190 = vmatprep.subr.mxu0 0.0
    %2191 = vmatpush1.msra.mxu0 %v2148
    %2192 = vmatprep.subr.mxu0 0.0
    %2193 = vmatpush1.msra.mxu0 %v2147
    %2194 = vmatprep.subr.mxu0 0.0
    %2195 = vmatpush2.msra.mxu0 0.0
    %2196 = vmatprep.subr.mxu0 0.0
    %2197 = vmatpush2.msra.mxu0 0.0
    %2198 = vmatprep.subr.mxu0 0.0
    %2199 = vmatpush2.msra.mxu0 0.0
    %2200 = vmatprep.subr.mxu0 0.0
    %2201 = vmatpush2.msra.mxu0 0.0
    %2202 = vmatprep.subr.mxu0 0.0
    %2203 = vmatpush2.msra.mxu0 0.0
    %2204 = vmatprep.subr.mxu0 0.0
    %2205 = vmatpush2.msra.mxu0 0.0
    %2206 = vmatprep.subr.mxu0 0.0
    %2207 = vmatpush2.msra.mxu0 0.0
    %2208 = vmatprep.subr.mxu0 0.0
    %2209 = vmatpush2.msra.mxu0 0.0
    %2210 = vmatprep.subr.mxu0 0.0
    %2211 = vmatpush2.msra.mxu0 0.0
    %2212 = vmatprep.subr.mxu0 0.0
    %2213 = vmatpush2.msra.mxu0 0.0
    %2214 = vmatprep.subr.mxu0 0.0
    %2215 = vmatpush2.msra.mxu0 0.0
    %2216 = vmatprep.subr.mxu0 0.0
    %2217 = vmatpush2.msra.mxu0 0.0
    %2218 = vmatprep.subr.mxu0 0.0
    %2219 = vmatpush2.msra.mxu0 0.0
    %2220 = vmatprep.subr.mxu0 0.0
    %2221 = vmatpush2.msra.mxu0 0.0
    %2222 = vmatprep.subr.mxu0 0.0
    %2223 = vmatpush2.msra.mxu0 0.0
    %2224 = vmatprep.subr.mxu0 0.0
    %2225 = vmatpush2.msra.mxu0 0.0
    %2226 = vmatprep.mubr.f32.mxu0 0.0
    %2227 = vmatmul.mubr.f32.gmra.mxu0 %v2151
    %v2228 = vpop.f32.mrf.mxu0
    %v2229 = vadd.f32 0.0, %v2228
    %v2230 = vpop.f32.mrf.mxu0
    %2231 = vmatprep.mubr.f32.mxu0 0.0
    %2232 = vmatmul.mubr.f32.gmra.mxu0 %v2154
    %v2233 = vpop.f32.mrf.mxu0
    %v2234 = vadd.f32 0.0, %v2233
    %v2235 = vpop.f32.mrf.mxu0
    %2236 = vmatprep.mubr.f32.mxu0 0.0
    %2237 = vmatmul.mubr.f32.gmra.mxu0 %v2157
    %v2238 = vpop.f32.mrf.mxu0
    %v2239 = vadd.f32 0.0, %v2238
    %v2240 = vpop.f32.mrf.mxu0
    %2241 = vmatprep.mubr.f32.mxu0 0.0
    %2242 = vmatmul.mubr.f32.gmra.mxu0 %v2160
    %v2243 = vpop.f32.mrf.mxu0
    %v2244 = vadd.f32 0.0, %v2243
    %v2245 = vpop.f32.mrf.mxu0
    %2246 = vdwg.mxu0
    %v2247 = vld [vmem:[%s4] sm:$0x7]
    %2248 = vset.pattern.permute.xlu0 18
    %2249 = vperm.xlu0 %2248, %v85
    %v2250 = vpop.permute.xlu0 %2249
    %v2253 = vsel %vm461, %v2247, 0
    %2255 = vmatprep.subr.mxu0 0.0
    %2256 = vmatpush1.msra.mxu0 0.0
    %2257 = vmatprep.subr.mxu0 0.0
    %2258 = vmatpush1.msra.mxu0 0.0
    %2259 = vmatprep.subr.mxu0 0.0
    %2260 = vmatpush1.msra.mxu0 0.0
    %2261 = vmatprep.subr.mxu0 0.0
    %2262 = vmatpush1.msra.mxu0 0.0
    %2263 = vmatprep.subr.mxu0 0.0
    %2264 = vmatpush1.msra.mxu0 0.0
    %2265 = vmatprep.subr.mxu0 0.0
    %2266 = vmatpush1.msra.mxu0 0.0
    %2267 = vmatprep.subr.mxu0 0.0
    %2268 = vmatpush1.msra.mxu0 0.0
    %2269 = vmatprep.subr.mxu0 0.0
    %2270 = vmatpush1.msra.mxu0 0.0
    %2271 = vmatprep.subr.mxu0 0.0
    %2272 = vmatpush1.msra.mxu0 0.0
    %2273 = vmatprep.subr.mxu0 0.0
    %2274 = vmatpush1.msra.mxu0 0.0
    %2275 = vmatprep.subr.mxu0 0.0
    %2276 = vmatpush1.msra.mxu0 0.0
    %2277 = vmatprep.subr.mxu0 0.0
    %2278 = vmatpush1.msra.mxu0 0.0
    %2279 = vmatprep.subr.mxu0 0.0
    %2280 = vmatpush1.msra.mxu0 %v2244
    %2281 = vmatprep.subr.mxu0 0.0
    %2282 = vmatpush1.msra.mxu0 %v2239
    %2283 = vmatprep.subr.mxu0 0.0
    %2284 = vmatpush1.msra.mxu0 %v2234
    %2285 = vmatprep.subr.mxu0 0.0
    %2286 = vmatpush1.msra.mxu0 %v2229
    %2287 = vmatprep.subr.mxu0 0.0
    %2288 = vmatpush2.msra.mxu0 0.0
    %2289 = vmatprep.subr.mxu0 0.0
    %2290 = vmatpush2.msra.mxu0 0.0
    %2291 = vmatprep.subr.mxu0 0.0
    %2292 = vmatpush2.msra.mxu0 0.0
    %2293 = vmatprep.subr.mxu0 0.0
    %2294 = vmatpush2.msra.mxu0 0.0
    %2295 = vmatprep.subr.mxu0 0.0
    %2296 = vmatpush2.msra.mxu0 0.0
    %2297 = vmatprep.subr.mxu0 0.0
    %2298 = vmatpush2.msra.mxu0 0.0
    %2299 = vmatprep.subr.mxu0 0.0
    %2300 = vmatpush2.msra.mxu0 0.0
    %2301 = vmatprep.subr.mxu0 0.0
    %2302 = vmatpush2.msra.mxu0 0.0
    %2303 = vmatprep.subr.mxu0 0.0
    %2304 = vmatpush2.msra.mxu0 0.0
    %2305 = vmatprep.subr.mxu0 0.0
    %2306 = vmatpush2.msra.mxu0 0.0
    %2307 = vmatprep.subr.mxu0 0.0
    %2308 = vmatpush2.msra.mxu0 0.0
    %2309 = vmatprep.subr.mxu0 0.0
    %2310 = vmatpush2.msra.mxu0 0.0
    %2311 = vmatprep.subr.mxu0 0.0
    %2312 = vmatpush2.msra.mxu0 0.0
    %2313 = vmatprep.subr.mxu0 0.0
    %2314 = vmatpush2.msra.mxu0 0.0
    %2315 = vmatprep.subr.mxu0 0.0
    %2316 = vmatpush2.msra.mxu0 0.0
    %2317 = vmatprep.subr.mxu0 0.0
    %2318 = vmatpush2.msra.mxu0 0.0
    %2319 = vmatprep.mubr.f32.mxu0 0.0
    %2320 = vmatmul.mubr.f32.gmra.mxu0 %v2253
    %v2321 = vpop.f32.mrf.mxu0
    %v2322 = vadd.f32 %v2250, %v2321
    %v2323 = vpop.f32.mrf.mxu0
    %2324 = vdwg.mxu0
    %vm2325 = vcmask 59392
    %2326 = vst.msk [vmem:[%s8] sm:$0x7] %vm2325, %v2322
    // Predicated region
    $region50: #{tpu_custom_call.1} parent=1 // pred_check
      _
    $region51: #{tpu_custom_call.1} parent=1 // pred_check_branch
      %2328 = sbr.rel (0) target = $region53
    $region52: #{tpu_custom_call.1} parent=1 // pred_region
      _
    $region53: #{tpu_custom_call.1} parent=1 // pred_fallthru
      _
    // Predicated region
    $region54: #{tpu_custom_call.1} parent=1 // pred_check
      _
    $region55: #{tpu_custom_call.1} parent=1 // pred_check_branch
      %2330 = sbr.rel (0) target = $region57
    $region56: #{tpu_custom_call.1} parent=1 // pred_region
      _
    $region57: #{tpu_custom_call.1} parent=1 // pred_fallthru
      _
    %2331 = vsyncpa [#allocation3], 1
    %2332 = vsyncpa [#allocation5], 1
    %2333 = vsyncpa [#allocation8], 1

</llo_original>
